<compile_context>
chip_gen: v6e
topology: v6e:2x2x1
jax: 0.10.0
libtpu: 0.0.40
codegen_flags: <defaults>
</compile_context>

<pallas_src>
import jax
import jax.numpy as jnp
import numpy as np
from jax.experimental import pallas as pl
from jax.experimental.pallas import tpu as pltpu

# ---- module configuration (forward asserts B=1, C=1, H=256, W=64) ----------
B, C, H, W = 1, 1, 256, 64
INPUT_SHAPE = (1, 2, H, W)        # add_weight_{real,imag} parameter shape
SLOPE = 5.0
SAMPLE_SLOPE = 12.0
SPARSITY = 0.6

LANES = 128
P = (H * W) // LANES              # 128 rows per channel after lane-dense reshape


def _sigmoid_eup(x):
    # One EUP push per vreg (tanh) instead of exp + divide.
    return 0.5 * jnp.tanh(0.5 * x) + 0.5


def _memc_loupe2_kernel(mask_ref, wr_ref, wi_ref, cw_ref, cb_ref, th_ref, out_ref):
    # ---- hoist SMEM scalars once, pre-scaled by SLOPE -----------------------
    w = [[cw_ref[oc, ic] * SLOPE for ic in range(4)] for oc in range(2)]
    b = [cb_ref[oc] * SLOPE for oc in range(2)]

    # 0 * kspace_mc[:, 0, :, :] — kept (plain add) so NaN/Inf in the input mask
    # propagates exactly as in the PyTorch module.
    z = mask_ref[...] * 0.0                          # (P, 128)

    # ---- pass 1: 1x1 Conv2d(4 -> 2) + slope + sigmoid, stored to out_ref ----
    # channel order after torch.cat((real, imag), dim=1): [r0, r1, i0, i1]
    # Balanced tree keeps VALU dependency depth low (no f32 FMA on v5e/v6e).
    for oc in range(2):
        acc = (wr_ref[0] * w[oc][0] + wr_ref[1] * w[oc][1]) \
            + (wi_ref[0] * w[oc][2] + wi_ref[1] * w[oc][3])
        acc = acc + (z + b[oc])                      # acc == SLOPE * conv[oc]
        out_ref[oc] = _sigmoid_eup(acc)              # out used as scratch

    # ---- global mean + sparsity renormalization (single fused reduce) -------
    total = jnp.sum(out_ref[0] + out_ref[1])
    xbar = total * (1.0 / (2.0 * P * LANES))
    r = SPARSITY / xbar
    beta = (1.0 - SPARSITY) / (1.0 - xbar)
    le = r <= 1.0
    a = jnp.where(le, r, beta)                       # scalar
    c = jnp.where(le, 0.0, 1.0 - beta)               # scalar
    # le*p*r + (1-le)*(1-(1-p)*beta)  ==  a*p + c

    # ---- pass 2: soft thresholding, sigmoid(sample_slope*(p - thresh)) ------
    for oc in range(2):
        x = SAMPLE_SLOPE * (a * out_ref[oc] + c - th_ref[oc])
        out_ref[oc] = _sigmoid_eup(x)


def memc_loupe2_forward(mask, add_w_real, add_w_imag, conv_w, conv_b, threshs):
    """mask: (1,1,256,64) NCHW float32 -> returns (1,2,256,64) float32."""
    assert mask.shape == (B, C, H, W)
    mask2d = mask.reshape(P, LANES).astype(jnp.float32)
    wr = add_w_real.reshape(2, P, LANES)
    wi = add_w_imag.reshape(2, P, LANES)
    th = threshs.reshape(2, P, LANES)
    cw = conv_w.reshape(2, 4)                        # 1x1 kernel -> (out_c, in_c)
    cb = conv_b

    n_elem = 2 * H * W                               # output elements
    cost = pl.CostEstimate(
        flops=18 * n_elem,
        transcendentals=2 * n_elem,
        bytes_accessed=(1 + 2 + 2 + 2 + 2) * H * W * 4,
    )

    out = pl.pallas_call(
        _memc_loupe2_kernel,
        out_shape=jax.ShapeDtypeStruct((2, P, LANES), jnp.float32),
        in_specs=[
            pl.BlockSpec(memory_space=pltpu.MemorySpace.VMEM),   # mask (P,128)
            pl.BlockSpec(memory_space=pltpu.MemorySpace.VMEM),   # add_weight_real
            pl.BlockSpec(memory_space=pltpu.MemorySpace.VMEM),   # add_weight_imag
            pl.BlockSpec(memory_space=pltpu.MemorySpace.SMEM),   # conv weight (2,4)
            pl.BlockSpec(memory_space=pltpu.MemorySpace.SMEM),   # conv bias   (2,)
            pl.BlockSpec(memory_space=pltpu.MemorySpace.VMEM),   # thresholds
        ],
        out_specs=pl.BlockSpec(memory_space=pltpu.MemorySpace.VMEM),
        cost_estimate=cost,
    )(mask2d, wr, wi, cw, cb, th)

    return out.reshape(1, 2, H, W)


def memc_loupe2_reference(mask, add_w_real, add_w_imag, conv_w, conv_b, threshs):
    """Pure-JAX reference mirroring the PyTorch forward (option=True)."""
    z = 0.0 * mask[:, 0, :, :]
    lr = z + add_w_real
    li = z + add_w_imag
    x = jnp.concatenate([lr, li], axis=1)                        # (1,4,H,W)
    cw = conv_w.reshape(2, 4)
    conv = jnp.einsum("oi,bihw->bohw", cw, x) + conv_b[None, :, None, None]
    prob = jax.nn.sigmoid(SLOPE * conv)
    xbar = jnp.mean(prob)
    r = SPARSITY / xbar
    beta = (1.0 - SPARSITY) / (1.0 - xbar)
    le = (r <= 1.0).astype(jnp.float32)
    prob = le * prob * r + (1.0 - le) * (1.0 - (1.0 - prob) * beta)
    return jax.nn.sigmoid(SAMPLE_SLOPE * (prob - threshs))


if __name__ == "__main__":
    key = jax.random.PRNGKey(0)
    k_mask, k_wr, k_wi, k_cw, k_cb, k_th = jax.random.split(key, 6)

    # input "mask" (the forward arg), NCHW
    mask = jax.random.uniform(k_mask, (B, C, H, W), dtype=jnp.float32)

    # parameters, initialized like the module: -log(1/U - 1) / slope
    u_r = jax.random.uniform(k_wr, INPUT_SHAPE, dtype=jnp.float32,
                             minval=1e-6, maxval=1.0 - 1e-6)
    u_i = jax.random.uniform(k_wi, INPUT_SHAPE, dtype=jnp.float32,
                             minval=1e-6, maxval=1.0 - 1e-6)
    add_w_real = -jnp.log(1.0 / u_r - 1.0) / SLOPE
    add_w_imag = -jnp.log(1.0 / u_i - 1.0) / SLOPE

    # Conv2d(4, 2, 1) parameters (deterministic synthetic init)
    conv_w = jax.random.uniform(k_cw, (2, 4, 1, 1), dtype=jnp.float32,
                                minval=-0.5, maxval=0.5)
    conv_b = jax.random.uniform(k_cb, (2,), dtype=jnp.float32,
                                minval=-0.5, maxval=0.5)

    # random thresholds (drawn per forward call in the PyTorch module; passed
    # explicitly here so the kernel is deterministic and checkable)
    threshs = jax.random.uniform(k_th, (1, 2, H, W), dtype=jnp.float32)

    out = memc_loupe2_forward(mask, add_w_real, add_w_imag, conv_w, conv_b, threshs)
    out = jax.block_until_ready(out)

    ref = memc_loupe2_reference(mask, add_w_real, add_w_imag, conv_w, conv_b, threshs)
    assert out.shape == (1, 2, H, W)
    np.testing.assert_allclose(np.asarray(out), np.asarray(ref),
                               rtol=1e-5, atol=1e-5)
    print("KERNEL_OK")
</pallas_src>

<mosaic_0001>
module attributes {stable_mosaic.version = 11 : i64} {
  func.func @_memc_loupe2_kernel(%arg0: memref<128x128xf32, #tpu.memory_space<vmem>>, %arg1: memref<2x128x128xf32, #tpu.memory_space<vmem>>, %arg2: memref<2x128x128xf32, #tpu.memory_space<vmem>>, %arg3: memref<2x4xf32, #tpu.memory_space<smem>>, %arg4: memref<2xf32, #tpu.memory_space<smem>>, %arg5: memref<2x128x128xf32, #tpu.memory_space<vmem>>, %arg6: memref<2x128x128xf32, #tpu.memory_space<vmem>>) attributes {dimension_semantics = [], scalar_prefetch = 0 : i64, scratch_operands = 0 : i64, tpu.core_type = #tpu.core_type<tc>} {
    %c0 = arith.constant 0 : index
    %c0_0 = arith.constant 0 : index
    %0 = memref.load %arg3[%c0, %c0_0] : memref<2x4xf32, #tpu.memory_space<smem>>
    %cst = arith.constant 5.000000e+00 : f32
    %1 = arith.mulf %0, %cst : f32
    %c0_1 = arith.constant 0 : index
    %c1 = arith.constant 1 : index
    %2 = memref.load %arg3[%c0_1, %c1] : memref<2x4xf32, #tpu.memory_space<smem>>
    %cst_2 = arith.constant 5.000000e+00 : f32
    %3 = arith.mulf %2, %cst_2 : f32
    %c0_3 = arith.constant 0 : index
    %c2 = arith.constant 2 : index
    %4 = memref.load %arg3[%c0_3, %c2] : memref<2x4xf32, #tpu.memory_space<smem>>
    %cst_4 = arith.constant 5.000000e+00 : f32
    %5 = arith.mulf %4, %cst_4 : f32
    %c0_5 = arith.constant 0 : index
    %c3 = arith.constant 3 : index
    %6 = memref.load %arg3[%c0_5, %c3] : memref<2x4xf32, #tpu.memory_space<smem>>
    %cst_6 = arith.constant 5.000000e+00 : f32
    %7 = arith.mulf %6, %cst_6 : f32
    %c1_7 = arith.constant 1 : index
    %c0_8 = arith.constant 0 : index
    %8 = memref.load %arg3[%c1_7, %c0_8] : memref<2x4xf32, #tpu.memory_space<smem>>
    %cst_9 = arith.constant 5.000000e+00 : f32
    %9 = arith.mulf %8, %cst_9 : f32
    %c1_10 = arith.constant 1 : index
    %c1_11 = arith.constant 1 : index
    %10 = memref.load %arg3[%c1_10, %c1_11] : memref<2x4xf32, #tpu.memory_space<smem>>
    %cst_12 = arith.constant 5.000000e+00 : f32
    %11 = arith.mulf %10, %cst_12 : f32
    %c1_13 = arith.constant 1 : index
    %c2_14 = arith.constant 2 : index
    %12 = memref.load %arg3[%c1_13, %c2_14] : memref<2x4xf32, #tpu.memory_space<smem>>
    %cst_15 = arith.constant 5.000000e+00 : f32
    %13 = arith.mulf %12, %cst_15 : f32
    %c1_16 = arith.constant 1 : index
    %c3_17 = arith.constant 3 : index
    %14 = memref.load %arg3[%c1_16, %c3_17] : memref<2x4xf32, #tpu.memory_space<smem>>
    %cst_18 = arith.constant 5.000000e+00 : f32
    %15 = arith.mulf %14, %cst_18 : f32
    %c0_19 = arith.constant 0 : index
    %16 = memref.load %arg4[%c0_19] : memref<2xf32, #tpu.memory_space<smem>>
    %cst_20 = arith.constant 5.000000e+00 : f32
    %17 = arith.mulf %16, %cst_20 : f32
    %c1_21 = arith.constant 1 : index
    %18 = memref.load %arg4[%c1_21] : memref<2xf32, #tpu.memory_space<smem>>
    %cst_22 = arith.constant 5.000000e+00 : f32
    %19 = arith.mulf %18, %cst_22 : f32
    %c0_23 = arith.constant 0 : index
    %c0_24 = arith.constant 0 : index
    %20 = vector.load %arg0[%c0_23, %c0_24] : memref<128x128xf32, #tpu.memory_space<vmem>>, vector<128x128xf32>
    %cst_25 = arith.constant 0.000000e+00 : f32
    %21 = vector.broadcast %cst_25 : f32 to vector<128x128xf32>
    %22 = arith.mulf %20, %21 : vector<128x128xf32>
    %c0_26 = arith.constant 0 : index
    %c0_27 = arith.constant 0 : index
    %c0_28 = arith.constant 0 : index
    %23 = vector.load %arg1[%c0_26, %c0_27, %c0_28] : memref<2x128x128xf32, #tpu.memory_space<vmem>>, vector<1x128x128xf32>
    %24 = vector.shape_cast %23 : vector<1x128x128xf32> to vector<128x128xf32>
    %25 = vector.broadcast %1 : f32 to vector<128x128xf32>
    %26 = arith.mulf %24, %25 : vector<128x128xf32>
    %c1_29 = arith.constant 1 : index
    %c0_30 = arith.constant 0 : index
    %c0_31 = arith.constant 0 : index
    %27 = vector.load %arg1[%c1_29, %c0_30, %c0_31] : memref<2x128x128xf32, #tpu.memory_space<vmem>>, vector<1x128x128xf32>
    %28 = vector.shape_cast %27 : vector<1x128x128xf32> to vector<128x128xf32>
    %29 = vector.broadcast %3 : f32 to vector<128x128xf32>
    %30 = arith.mulf %28, %29 : vector<128x128xf32>
    %31 = arith.addf %26, %30 : vector<128x128xf32>
    %c0_32 = arith.constant 0 : index
    %c0_33 = arith.constant 0 : index
    %c0_34 = arith.constant 0 : index
    %32 = vector.load %arg2[%c0_32, %c0_33, %c0_34] : memref<2x128x128xf32, #tpu.memory_space<vmem>>, vector<1x128x128xf32>
    %33 = vector.shape_cast %32 : vector<1x128x128xf32> to vector<128x128xf32>
    %34 = vector.broadcast %5 : f32 to vector<128x128xf32>
    %35 = arith.mulf %33, %34 : vector<128x128xf32>
    %c1_35 = arith.constant 1 : index
    %c0_36 = arith.constant 0 : index
    %c0_37 = arith.constant 0 : index
    %36 = vector.load %arg2[%c1_35, %c0_36, %c0_37] : memref<2x128x128xf32, #tpu.memory_space<vmem>>, vector<1x128x128xf32>
    %37 = vector.shape_cast %36 : vector<1x128x128xf32> to vector<128x128xf32>
    %38 = vector.broadcast %7 : f32 to vector<128x128xf32>
    %39 = arith.mulf %37, %38 : vector<128x128xf32>
    %40 = arith.addf %35, %39 : vector<128x128xf32>
    %41 = arith.addf %31, %40 : vector<128x128xf32>
    %42 = vector.broadcast %17 : f32 to vector<128x128xf32>
    %43 = arith.addf %22, %42 : vector<128x128xf32>
    %44 = arith.addf %41, %43 : vector<128x128xf32>
    %cst_38 = arith.constant 5.000000e-01 : f32
    %45 = vector.broadcast %cst_38 : f32 to vector<128x128xf32>
    %46 = arith.mulf %45, %44 : vector<128x128xf32>
    %47 = math.tanh %46 : vector<128x128xf32>
    %cst_39 = arith.constant 5.000000e-01 : f32
    %48 = vector.broadcast %cst_39 : f32 to vector<128x128xf32>
    %49 = arith.mulf %48, %47 : vector<128x128xf32>
    %cst_40 = arith.constant 5.000000e-01 : f32
    %50 = vector.broadcast %cst_40 : f32 to vector<128x128xf32>
    %51 = arith.addf %49, %50 : vector<128x128xf32>
    %c0_41 = arith.constant 0 : index
    %c0_42 = arith.constant 0 : index
    %c0_43 = arith.constant 0 : index
    %52 = vector.load %arg6[%c0_41, %c0_42, %c0_43] : memref<2x128x128xf32, #tpu.memory_space<vmem>>, vector<1x128x128xf32>
    %53 = vector.shape_cast %52 : vector<1x128x128xf32> to vector<128x128xf32>
    %54 = vector.shape_cast %51 : vector<128x128xf32> to vector<1x128x128xf32>
    tpu.vector_store %arg6[%c0_41, %c0_42, %c0_43], %54 {strides = array<i32>} : memref<2x128x128xf32, #tpu.memory_space<vmem>>, vector<1x128x128xf32>,
    %c0_44 = arith.constant 0 : index
    %c0_45 = arith.constant 0 : index
    %c0_46 = arith.constant 0 : index
    %55 = vector.load %arg1[%c0_44, %c0_45, %c0_46] : memref<2x128x128xf32, #tpu.memory_space<vmem>>, vector<1x128x128xf32>
    %56 = vector.shape_cast %55 : vector<1x128x128xf32> to vector<128x128xf32>
    %57 = vector.broadcast %9 : f32 to vector<128x128xf32>
    %58 = arith.mulf %56, %57 : vector<128x128xf32>
    %c1_47 = arith.constant 1 : index
    %c0_48 = arith.constant 0 : index
    %c0_49 = arith.constant 0 : index
    %59 = vector.load %arg1[%c1_47, %c0_48, %c0_49] : memref<2x128x128xf32, #tpu.memory_space<vmem>>, vector<1x128x128xf32>
    %60 = vector.shape_cast %59 : vector<1x128x128xf32> to vector<128x128xf32>
    %61 = vector.broadcast %11 : f32 to vector<128x128xf32>
    %62 = arith.mulf %60, %61 : vector<128x128xf32>
    %63 = arith.addf %58, %62 : vector<128x128xf32>
    %c0_50 = arith.constant 0 : index
    %c0_51 = arith.constant 0 : index
    %c0_52 = arith.constant 0 : index
    %64 = vector.load %arg2[%c0_50, %c0_51, %c0_52] : memref<2x128x128xf32, #tpu.memory_space<vmem>>, vector<1x128x128xf32>
    %65 = vector.shape_cast %64 : vector<1x128x128xf32> to vector<128x128xf32>
    %66 = vector.broadcast %13 : f32 to vector<128x128xf32>
    %67 = arith.mulf %65, %66 : vector<128x128xf32>
    %c1_53 = arith.constant 1 : index
    %c0_54 = arith.constant 0 : index
    %c0_55 = arith.constant 0 : index
    %68 = vector.load %arg2[%c1_53, %c0_54, %c0_55] : memref<2x128x128xf32, #tpu.memory_space<vmem>>, vector<1x128x128xf32>
    %69 = vector.shape_cast %68 : vector<1x128x128xf32> to vector<128x128xf32>
    %70 = vector.broadcast %15 : f32 to vector<128x128xf32>
    %71 = arith.mulf %69, %70 : vector<128x128xf32>
    %72 = arith.addf %67, %71 : vector<128x128xf32>
    %73 = arith.addf %63, %72 : vector<128x128xf32>
    %74 = vector.broadcast %19 : f32 to vector<128x128xf32>
    %75 = arith.addf %22, %74 : vector<128x128xf32>
    %76 = arith.addf %73, %75 : vector<128x128xf32>
    %cst_56 = arith.constant 5.000000e-01 : f32
    %77 = vector.broadcast %cst_56 : f32 to vector<128x128xf32>
    %78 = arith.mulf %77, %76 : vector<128x128xf32>
    %79 = math.tanh %78 : vector<128x128xf32>
    %cst_57 = arith.constant 5.000000e-01 : f32
    %80 = vector.broadcast %cst_57 : f32 to vector<128x128xf32>
    %81 = arith.mulf %80, %79 : vector<128x128xf32>
    %cst_58 = arith.constant 5.000000e-01 : f32
    %82 = vector.broadcast %cst_58 : f32 to vector<128x128xf32>
    %83 = arith.addf %81, %82 : vector<128x128xf32>
    %c1_59 = arith.constant 1 : index
    %c0_60 = arith.constant 0 : index
    %c0_61 = arith.constant 0 : index
    %84 = vector.load %arg6[%c1_59, %c0_60, %c0_61] : memref<2x128x128xf32, #tpu.memory_space<vmem>>, vector<1x128x128xf32>
    %85 = vector.shape_cast %84 : vector<1x128x128xf32> to vector<128x128xf32>
    %86 = vector.shape_cast %83 : vector<128x128xf32> to vector<1x128x128xf32>
    tpu.vector_store %arg6[%c1_59, %c0_60, %c0_61], %86 {strides = array<i32>} : memref<2x128x128xf32, #tpu.memory_space<vmem>>, vector<1x128x128xf32>,
    %c0_62 = arith.constant 0 : index
    %c0_63 = arith.constant 0 : index
    %c0_64 = arith.constant 0 : index
    %87 = vector.load %arg6[%c0_62, %c0_63, %c0_64] : memref<2x128x128xf32, #tpu.memory_space<vmem>>, vector<1x128x128xf32>
    %88 = vector.shape_cast %87 : vector<1x128x128xf32> to vector<128x128xf32>
    %c1_65 = arith.constant 1 : index
    %c0_66 = arith.constant 0 : index
    %c0_67 = arith.constant 0 : index
    %89 = vector.load %arg6[%c1_65, %c0_66, %c0_67] : memref<2x128x128xf32, #tpu.memory_space<vmem>>, vector<1x128x128xf32>
    %90 = vector.shape_cast %89 : vector<1x128x128xf32> to vector<128x128xf32>
    %91 = arith.addf %88, %90 : vector<128x128xf32>
    %92 = vector.shape_cast %91 : vector<128x128xf32> to vector<1x128x128xf32>
    %cst_68 = arith.constant dense<0.000000e+00> : vector<1xf32>
    %93 = vector.multi_reduction <add>, %92, %cst_68 [1, 2] : vector<1x128x128xf32> to vector<1xf32>
    %94 = vector.shape_cast %93 : vector<1xf32> to vector<1x1x1xf32>
    %95 = vector.extract %94[0, 0, 0] : f32 from vector<1x1x1xf32>
    %cst_69 = arith.constant 3.05175781E-5 : f32
    %96 = arith.mulf %95, %cst_69 : f32
    %cst_70 = arith.constant 6.000000e-01 : f32
    %97 = arith.divf %cst_70, %96 : f32
    %cst_71 = arith.constant 1.000000e+00 : f32
    %98 = arith.subf %cst_71, %96 : f32
    %cst_72 = arith.constant 4.000000e-01 : f32
    %99 = arith.divf %cst_72, %98 : f32
    %cst_73 = arith.constant 1.000000e+00 : f32
    %100 = arith.cmpf ole, %97, %cst_73 : f32
    %101 = arith.select %100, %97, %99 : f32
    %cst_74 = arith.constant 1.000000e+00 : f32
    %102 = arith.subf %cst_74, %99 : f32
    %cst_75 = arith.constant 0.000000e+00 : f32
    %103 = arith.select %100, %cst_75, %102 : f32
    %c0_76 = arith.constant 0 : index
    %c0_77 = arith.constant 0 : index
    %c0_78 = arith.constant 0 : index
    %104 = vector.load %arg6[%c0_76, %c0_77, %c0_78] : memref<2x128x128xf32, #tpu.memory_space<vmem>>, vector<1x128x128xf32>
    %105 = vector.shape_cast %104 : vector<1x128x128xf32> to vector<128x128xf32>
    %106 = vector.broadcast %101 : f32 to vector<128x128xf32>
    %107 = arith.mulf %106, %105 : vector<128x128xf32>
    %108 = vector.broadcast %103 : f32 to vector<128x128xf32>
    %109 = arith.addf %107, %108 : vector<128x128xf32>
    %c0_79 = arith.constant 0 : index
    %c0_80 = arith.constant 0 : index
    %c0_81 = arith.constant 0 : index
    %110 = vector.load %arg5[%c0_79, %c0_80, %c0_81] : memref<2x128x128xf32, #tpu.memory_space<vmem>>, vector<1x128x128xf32>
    %111 = vector.shape_cast %110 : vector<1x128x128xf32> to vector<128x128xf32>
    %112 = arith.subf %109, %111 : vector<128x128xf32>
    %cst_82 = arith.constant 1.200000e+01 : f32
    %113 = vector.broadcast %cst_82 : f32 to vector<128x128xf32>
    %114 = arith.mulf %113, %112 : vector<128x128xf32>
    %cst_83 = arith.constant 5.000000e-01 : f32
    %115 = vector.broadcast %cst_83 : f32 to vector<128x128xf32>
    %116 = arith.mulf %115, %114 : vector<128x128xf32>
    %117 = math.tanh %116 : vector<128x128xf32>
    %cst_84 = arith.constant 5.000000e-01 : f32
    %118 = vector.broadcast %cst_84 : f32 to vector<128x128xf32>
    %119 = arith.mulf %118, %117 : vector<128x128xf32>
    %cst_85 = arith.constant 5.000000e-01 : f32
    %120 = vector.broadcast %cst_85 : f32 to vector<128x128xf32>
    %121 = arith.addf %119, %120 : vector<128x128xf32>
    %c0_86 = arith.constant 0 : index
    %c0_87 = arith.constant 0 : index
    %c0_88 = arith.constant 0 : index
    %122 = vector.load %arg6[%c0_86, %c0_87, %c0_88] : memref<2x128x128xf32, #tpu.memory_space<vmem>>, vector<1x128x128xf32>
    %123 = vector.shape_cast %122 : vector<1x128x128xf32> to vector<128x128xf32>
    %124 = vector.shape_cast %121 : vector<128x128xf32> to vector<1x128x128xf32>
    tpu.vector_store %arg6[%c0_86, %c0_87, %c0_88], %124 {strides = array<i32>} : memref<2x128x128xf32, #tpu.memory_space<vmem>>, vector<1x128x128xf32>,
    %c1_89 = arith.constant 1 : index
    %c0_90 = arith.constant 0 : index
    %c0_91 = arith.constant 0 : index
    %125 = vector.load %arg6[%c1_89, %c0_90, %c0_91] : memref<2x128x128xf32, #tpu.memory_space<vmem>>, vector<1x128x128xf32>
    %126 = vector.shape_cast %125 : vector<1x128x128xf32> to vector<128x128xf32>
    %127 = vector.broadcast %101 : f32 to vector<128x128xf32>
    %128 = arith.mulf %127, %126 : vector<128x128xf32>
    %129 = vector.broadcast %103 : f32 to vector<128x128xf32>
    %130 = arith.addf %128, %129 : vector<128x128xf32>
    %c1_92 = arith.constant 1 : index
    %c0_93 = arith.constant 0 : index
    %c0_94 = arith.constant 0 : index
    %131 = vector.load %arg5[%c1_92, %c0_93, %c0_94] : memref<2x128x128xf32, #tpu.memory_space<vmem>>, vector<1x128x128xf32>
    %132 = vector.shape_cast %131 : vector<1x128x128xf32> to vector<128x128xf32>
    %133 = arith.subf %130, %132 : vector<128x128xf32>
    %cst_95 = arith.constant 1.200000e+01 : f32
    %134 = vector.broadcast %cst_95 : f32 to vector<128x128xf32>
    %135 = arith.mulf %134, %133 : vector<128x128xf32>
    %cst_96 = arith.constant 5.000000e-01 : f32
    %136 = vector.broadcast %cst_96 : f32 to vector<128x128xf32>
    %137 = arith.mulf %136, %135 : vector<128x128xf32>
    %138 = math.tanh %137 : vector<128x128xf32>
    %cst_97 = arith.constant 5.000000e-01 : f32
    %139 = vector.broadcast %cst_97 : f32 to vector<128x128xf32>
    %140 = arith.mulf %139, %138 : vector<128x128xf32>
    %cst_98 = arith.constant 5.000000e-01 : f32
    %141 = vector.broadcast %cst_98 : f32 to vector<128x128xf32>
    %142 = arith.addf %140, %141 : vector<128x128xf32>
    %c1_99 = arith.constant 1 : index
    %c0_100 = arith.constant 0 : index
    %c0_101 = arith.constant 0 : index
    %143 = vector.load %arg6[%c1_99, %c0_100, %c0_101] : memref<2x128x128xf32, #tpu.memory_space<vmem>>, vector<1x128x128xf32>
    %144 = vector.shape_cast %143 : vector<1x128x128xf32> to vector<128x128xf32>
    %145 = vector.shape_cast %142 : vector<128x128xf32> to vector<1x128x128xf32>
    tpu.vector_store %arg6[%c1_99, %c0_100, %c0_101], %145 {strides = array<i32>} : memref<2x128x128xf32, #tpu.memory_space<vmem>>, vector<1x128x128xf32>,
    return
  }
}

</mosaic_0001>

<llo_original>
// kernel: tpu_custom_call.1
$region0: #{tpu_custom_call.1}
  #allocation0 [shape = 'u32[]', space=smem, size = 0x4, offset = 0x4, fixed_abs, tag = 'smem constant byte address 0x4 - core index']
  #allocation1 [shape = 'u32[144,128]{1,0:T(1,128)}', space=vmem, size = 0x12000, scoped, tag = 'internal scratch']
  %s0 = inlined_call_operand.hbm [shape: f32[128,128], index: 0, kind: input, shape index: {}]
  %s1 = inlined_call_operand.hbm [shape: f32[2,128,128], index: 1, kind: input, shape index: {}]
  %s2 = inlined_call_operand.hbm [shape: f32[2,128,128], index: 2, kind: input, shape index: {}]
  %s3 = inlined_call_operand.vmem [shape: f32[2,4], index: 3, kind: input, shape index: {}]
  %s4 = inlined_call_operand.vmem [shape: f32[2], index: 4, kind: input, shape index: {}]
  %s5 = inlined_call_operand.hbm [shape: f32[2,128,128], index: 5, kind: input, shape index: {}]
  %s6 = inlined_call_operand.hbm [shape: f32[2,128,128], index: 6, kind: output, shape index: {}]
  %s7 = sld [smem:[#allocation0]]
  $region58: #{tpu_custom_call.1} parent=0
    _
  %s9 = ssub.s32 1, %s7
  %s10 = scalar_select 0, %s9, %s7
  $region1: #{tpu_custom_call.1} parent=0
    #allocation2 [shape = 'u8[65536]{0}', space=vmem, size = 0x10000, scoped, tag = 'input window, operand 0, single buffered']
    #allocation3 [shape = 's32[1]{0}', space=sflag, size = 0x4, scoped, tag = 'scoped memory for tpu_custom_call.1']
    #allocation4 [shape = 's32[1]{0}', space=sflag, size = 0x4, scoped, tag = 'scoped memory for tpu_custom_call.1']
    #allocation5 [shape = 's32[1]{0}', space=sflag, size = 0x4, scoped, tag = 'scoped memory for tpu_custom_call.1']
    #allocation6 [shape = 'u8[131072]{0}', space=vmem, size = 0x20000, scoped, tag = 'input window, operand 1, single buffered']
    #allocation7 [shape = 's32[1]{0}', space=sflag, size = 0x4, scoped, tag = 'scoped memory for tpu_custom_call.1']
    #allocation8 [shape = 'u8[131072]{0}', space=vmem, size = 0x20000, scoped, tag = 'input window, operand 2, single buffered']
    #allocation9 [shape = 'u8[1024]{0}', space=smem, size = 0x400, scoped, tag = 'input window, operand 3, single buffered']
    #allocation10 [shape = 'u8[512]{0}', space=smem, size = 0x200, scoped, tag = 'input window, operand 4, single buffered']
    #allocation11 [shape = 's32[1]{0}', space=sflag, size = 0x4, scoped, tag = 'scoped memory for tpu_custom_call.1']
    #allocation12 [shape = 'u8[131072]{0}', space=vmem, size = 0x20000, scoped, tag = 'input window, operand 5, single buffered']
    #allocation13 [shape = 's32[1]{0}', space=sflag, size = 0x4, scoped, tag = 'scoped memory for tpu_custom_call.1']
    #allocation14 [shape = 'u8[131072]{0}', space=vmem, size = 0x20000, scoped, tag = 'output window, operand 0, single buffered']
    %11 = vsyncpa [#allocation3], 0
    %12 = vsyncpa [#allocation7], 0
    %13 = vsyncpa [#allocation5], 0
    %14 = vsyncpa [#allocation11], 0
    %15 = vsyncpa [#allocation13], 0
    %16 = vsyncpa [#allocation4], 0
    // Predicated region
    $region2: #{tpu_custom_call.1} parent=1 // pred_check
      _
    $region3: #{tpu_custom_call.1} parent=1 // pred_check_branch
      %18 = sbr.rel (0) target = $region5
    $region4: #{tpu_custom_call.1} parent=1 // pred_region
      %s20 = ssub.s32 2048, 2048
      %21 = vsyncadd [#allocation3], %s20
      %s22 = sshll.u32 [#allocation2], 4
      %s23 = int_to_ptr.vmem [resolvable:$true] %s22
      %28 = dma.hbm_to_vmem [thread:$0]  %s0, 2048, %s23, [#allocation3], 128, 128, 8
    $region5: #{tpu_custom_call.1} parent=1 // pred_fallthru
      _
    // Predicated region
    $region6: #{tpu_custom_call.1} parent=1 // pred_check
      _
    $region7: #{tpu_custom_call.1} parent=1 // pred_check_branch
      %30 = sbr.rel (0) target = $region9
    $region8: #{tpu_custom_call.1} parent=1 // pred_region
      %s32 = ssub.s32 4096, 4096
      %33 = vsyncadd [#allocation7], %s32
      %s34 = sshll.u32 [#allocation6], 4
      %s35 = int_to_ptr.vmem [resolvable:$true] %s34
      %40 = dma.hbm_to_vmem [thread:$0]  %s1, 4096, %s35, [#allocation7], 128, 128, 8
    $region9: #{tpu_custom_call.1} parent=1 // pred_fallthru
      _
    // Predicated region
    $region10: #{tpu_custom_call.1} parent=1 // pred_check
      _
    $region11: #{tpu_custom_call.1} parent=1 // pred_check_branch
      %42 = sbr.rel (0) target = $region13
    $region12: #{tpu_custom_call.1} parent=1 // pred_region
      %s44 = ssub.s32 4096, 4096
      %45 = vsyncadd [#allocation7], %s44
      %s46 = sshll.u32 [#allocation8], 4
      %s47 = int_to_ptr.vmem [resolvable:$true] %s46
      %52 = dma.hbm_to_vmem [thread:$0]  %s2, 4096, %s47, [#allocation7], 128, 128, 8
    $region13: #{tpu_custom_call.1} parent=1 // pred_fallthru
      _
    // Predicated region
    $region14: #{tpu_custom_call.1} parent=1 // pred_check
      _
    $region15: #{tpu_custom_call.1} parent=1 // pred_check_branch
      %54 = sbr.rel (0) target = $region17
    $region16: #{tpu_custom_call.1} parent=1 // pred_region
      %s56 = ssub.s32 32, 32
      %57 = vsyncadd [#allocation5], %s56
      %s59 = sshll.u32 %s3, 4
      %s60 = int_to_ptr.vmem [resolvable:$true] %s59
      %62 = dma.vmem_to_smem %s60, 32, [#allocation9], [#allocation5]
    $region17: #{tpu_custom_call.1} parent=1 // pred_fallthru
      _
    // Predicated region
    $region18: #{tpu_custom_call.1} parent=1 // pred_check
      _
    $region19: #{tpu_custom_call.1} parent=1 // pred_check_branch
      %64 = sbr.rel (0) target = $region21
    $region20: #{tpu_custom_call.1} parent=1 // pred_region
      %s66 = ssub.s32 16, 16
      %67 = vsyncadd [#allocation11], %s66
      %s69 = sshll.u32 %s4, 4
      %s70 = int_to_ptr.vmem [resolvable:$true] %s69
      %72 = dma.vmem_to_smem %s70, 16, [#allocation10], [#allocation11]
    $region21: #{tpu_custom_call.1} parent=1 // pred_fallthru
      _
    // Predicated region
    $region22: #{tpu_custom_call.1} parent=1 // pred_check
      _
    $region23: #{tpu_custom_call.1} parent=1 // pred_check_branch
      %74 = sbr.rel (0) target = $region25
    $region24: #{tpu_custom_call.1} parent=1 // pred_region
      %s76 = ssub.s32 4096, 4096
      %77 = vsyncadd [#allocation13], %s76
      %s78 = sshll.u32 [#allocation12], 4
      %s79 = int_to_ptr.vmem [resolvable:$true] %s78
      %84 = dma.hbm_to_vmem [thread:$0]  %s5, 4096, %s79, [#allocation13], 128, 128, 8
    $region25: #{tpu_custom_call.1} parent=1 // pred_fallthru
      _
    // Predicated region
    $region26: #{tpu_custom_call.1} parent=1 // pred_check
      _
    $region27: #{tpu_custom_call.1} parent=1 // pred_check_branch
      %86 = sbr.rel (0) target = $region29
    $region28: #{tpu_custom_call.1} parent=1 // pred_region
      %87 = dma.done [#allocation3], 2048
    $region29: #{tpu_custom_call.1} parent=1 // pred_fallthru
      _
    // Predicated region
    $region30: #{tpu_custom_call.1} parent=1 // pred_check
      _
    $region31: #{tpu_custom_call.1} parent=1 // pred_check_branch
      %89 = sbr.rel (0) target = $region33
    $region32: #{tpu_custom_call.1} parent=1 // pred_region
      %90 = dma.done [#allocation7], 4096
    $region33: #{tpu_custom_call.1} parent=1 // pred_fallthru
      _
    // Predicated region
    $region34: #{tpu_custom_call.1} parent=1 // pred_check
      _
    $region35: #{tpu_custom_call.1} parent=1 // pred_check_branch
      %92 = sbr.rel (0) target = $region37
    $region36: #{tpu_custom_call.1} parent=1 // pred_region
      %93 = dma.done [#allocation7], 4096
    $region37: #{tpu_custom_call.1} parent=1 // pred_fallthru
      _
    // Predicated region
    $region38: #{tpu_custom_call.1} parent=1 // pred_check
      _
    $region39: #{tpu_custom_call.1} parent=1 // pred_check_branch
      %95 = sbr.rel (0) target = $region41
    $region40: #{tpu_custom_call.1} parent=1 // pred_region
      %96 = dma.done [#allocation5], 32
    $region41: #{tpu_custom_call.1} parent=1 // pred_fallthru
      _
    // Predicated region
    $region42: #{tpu_custom_call.1} parent=1 // pred_check
      _
    $region43: #{tpu_custom_call.1} parent=1 // pred_check_branch
      %98 = sbr.rel (0) target = $region45
    $region44: #{tpu_custom_call.1} parent=1 // pred_region
      %99 = dma.done [#allocation11], 16
    $region45: #{tpu_custom_call.1} parent=1 // pred_fallthru
      _
    // Predicated region
    $region46: #{tpu_custom_call.1} parent=1 // pred_check
      _
    $region47: #{tpu_custom_call.1} parent=1 // pred_check_branch
      %101 = sbr.rel (0) target = $region49
    $region48: #{tpu_custom_call.1} parent=1 // pred_region
      %102 = dma.done [#allocation13], 4096
    $region49: #{tpu_custom_call.1} parent=1 // pred_fallthru
      _
    %103 = sfence
    %s104 = sld [smem:[#allocation9]]
    %s105 = smul.f32 %s104, 5.0
    %s106 = sld [smem:[#allocation9 + $0x1]]
    %s107 = smul.f32 %s106, 5.0
    %s108 = sld [smem:[#allocation9 + $0x2]]
    %s109 = smul.f32 %s108, 5.0
    %s110 = sld [smem:[#allocation9 + $0x3]]
    %s111 = smul.f32 %s110, 5.0
    %s112 = sld [smem:[#allocation9 + $0x80]]
    %s113 = smul.f32 %s112, 5.0
    %s114 = sld [smem:[#allocation9 + $0x81]]
    %s115 = smul.f32 %s114, 5.0
    %s116 = sld [smem:[#allocation9 + $0x82]]
    %s117 = smul.f32 %s116, 5.0
    %s118 = sld [smem:[#allocation9 + $0x83]]
    %s119 = smul.f32 %s118, 5.0
    %s120 = sld [smem:[#allocation10]]
    %s121 = smul.f32 %s120, 5.0
    %s122 = sld [smem:[#allocation10 + $0x1]]
    %s123 = smul.f32 %s122, 5.0
    %v124 = vld [vmem:[#allocation2] sm:$0xff]
    %v125 = vld [vmem:[#allocation2 + $0x8] sm:$0xff]
    %v126 = vld [vmem:[#allocation2 + $0x10] sm:$0xff]
    %v127 = vld [vmem:[#allocation2 + $0x18] sm:$0xff]
    %v128 = vld [vmem:[#allocation2 + $0x20] sm:$0xff]
    %v129 = vld [vmem:[#allocation2 + $0x28] sm:$0xff]
    %v130 = vld [vmem:[#allocation2 + $0x30] sm:$0xff]
    %v131 = vld [vmem:[#allocation2 + $0x38] sm:$0xff]
    %v132 = vld [vmem:[#allocation2 + $0x40] sm:$0xff]
    %v133 = vld [vmem:[#allocation2 + $0x48] sm:$0xff]
    %v134 = vld [vmem:[#allocation2 + $0x50] sm:$0xff]
    %v135 = vld [vmem:[#allocation2 + $0x58] sm:$0xff]
    %v136 = vld [vmem:[#allocation2 + $0x60] sm:$0xff]
    %v137 = vld [vmem:[#allocation2 + $0x68] sm:$0xff]
    %v138 = vld [vmem:[#allocation2 + $0x70] sm:$0xff]
    %v139 = vld [vmem:[#allocation2 + $0x78] sm:$0xff]
    %v140 = vmul.f32 %v124, 0.0
    %v141 = vmul.f32 %v125, 0.0
    %v142 = vmul.f32 %v126, 0.0
    %v143 = vmul.f32 %v127, 0.0
    %v144 = vmul.f32 %v128, 0.0
    %v145 = vmul.f32 %v129, 0.0
    %v146 = vmul.f32 %v130, 0.0
    %v147 = vmul.f32 %v131, 0.0
    %v148 = vmul.f32 %v132, 0.0
    %v149 = vmul.f32 %v133, 0.0
    %v150 = vmul.f32 %v134, 0.0
    %v151 = vmul.f32 %v135, 0.0
    %v152 = vmul.f32 %v136, 0.0
    %v153 = vmul.f32 %v137, 0.0
    %v154 = vmul.f32 %v138, 0.0
    %v155 = vmul.f32 %v139, 0.0
    %v156 = vld [vmem:[#allocation6] sm:$0xff]
    %v157 = vld [vmem:[#allocation6 + $0x8] sm:$0xff]
    %v158 = vld [vmem:[#allocation6 + $0x10] sm:$0xff]
    %v159 = vld [vmem:[#allocation6 + $0x18] sm:$0xff]
    %v160 = vld [vmem:[#allocation6 + $0x20] sm:$0xff]
    %v161 = vld [vmem:[#allocation6 + $0x28] sm:$0xff]
    %v162 = vld [vmem:[#allocation6 + $0x30] sm:$0xff]
    %v163 = vld [vmem:[#allocation6 + $0x38] sm:$0xff]
    %v164 = vld [vmem:[#allocation6 + $0x40] sm:$0xff]
    %v165 = vld [vmem:[#allocation6 + $0x48] sm:$0xff]
    %v166 = vld [vmem:[#allocation6 + $0x50] sm:$0xff]
    %v167 = vld [vmem:[#allocation6 + $0x58] sm:$0xff]
    %v168 = vld [vmem:[#allocation6 + $0x60] sm:$0xff]
    %v169 = vld [vmem:[#allocation6 + $0x68] sm:$0xff]
    %v170 = vld [vmem:[#allocation6 + $0x70] sm:$0xff]
    %v171 = vld [vmem:[#allocation6 + $0x78] sm:$0xff]
    %v172 = vstv %s105
    %v173 = vmul.f32 %v156, %v172
    %v174 = vmul.f32 %v157, %v172
    %v175 = vmul.f32 %v158, %v172
    %v176 = vmul.f32 %v159, %v172
    %v177 = vmul.f32 %v160, %v172
    %v178 = vmul.f32 %v161, %v172
    %v179 = vmul.f32 %v162, %v172
    %v180 = vmul.f32 %v163, %v172
    %v181 = vmul.f32 %v164, %v172
    %v182 = vmul.f32 %v165, %v172
    %v183 = vmul.f32 %v166, %v172
    %v184 = vmul.f32 %v167, %v172
    %v185 = vmul.f32 %v168, %v172
    %v186 = vmul.f32 %v169, %v172
    %v187 = vmul.f32 %v170, %v172
    %v188 = vmul.f32 %v171, %v172
    %s189 = scalar_lea.vmem [#allocation6], 128
    %v190 = vld [vmem:[%s189] sm:$0xff]
    %v191 = vld [vmem:[%s189 + $0x8] sm:$0xff]
    %v192 = vld [vmem:[%s189 + $0x10] sm:$0xff]
    %v193 = vld [vmem:[%s189 + $0x18] sm:$0xff]
    %v194 = vld [vmem:[%s189 + $0x20] sm:$0xff]
    %v195 = vld [vmem:[%s189 + $0x28] sm:$0xff]
    %v196 = vld [vmem:[%s189 + $0x30] sm:$0xff]
    %v197 = vld [vmem:[%s189 + $0x38] sm:$0xff]
    %v198 = vld [vmem:[%s189 + $0x40] sm:$0xff]
    %v199 = vld [vmem:[%s189 + $0x48] sm:$0xff]
    %v200 = vld [vmem:[%s189 + $0x50] sm:$0xff]
    %v201 = vld [vmem:[%s189 + $0x58] sm:$0xff]
    %v202 = vld [vmem:[%s189 + $0x60] sm:$0xff]
    %v203 = vld [vmem:[%s189 + $0x68] sm:$0xff]
    %v204 = vld [vmem:[%s189 + $0x70] sm:$0xff]
    %v205 = vld [vmem:[%s189 + $0x78] sm:$0xff]
    %v206 = vstv %s107
    %v207 = vmul.f32 %v190, %v206
    %v208 = vmul.f32 %v191, %v206
    %v209 = vmul.f32 %v192, %v206
    %v210 = vmul.f32 %v193, %v206
    %v211 = vmul.f32 %v194, %v206
    %v212 = vmul.f32 %v195, %v206
    %v213 = vmul.f32 %v196, %v206
    %v214 = vmul.f32 %v197, %v206
    %v215 = vmul.f32 %v198, %v206
    %v216 = vmul.f32 %v199, %v206
    %v217 = vmul.f32 %v200, %v206
    %v218 = vmul.f32 %v201, %v206
    %v219 = vmul.f32 %v202, %v206
    %v220 = vmul.f32 %v203, %v206
    %v221 = vmul.f32 %v204, %v206
    %v222 = vmul.f32 %v205, %v206
    %v223 = vadd.f32 %v173, %v207
    %v224 = vadd.f32 %v174, %v208
    %v225 = vadd.f32 %v175, %v209
    %v226 = vadd.f32 %v176, %v210
    %v227 = vadd.f32 %v177, %v211
    %v228 = vadd.f32 %v178, %v212
    %v229 = vadd.f32 %v179, %v213
    %v230 = vadd.f32 %v180, %v214
    %v231 = vadd.f32 %v181, %v215
    %v232 = vadd.f32 %v182, %v216
    %v233 = vadd.f32 %v183, %v217
    %v234 = vadd.f32 %v184, %v218
    %v235 = vadd.f32 %v185, %v219
    %v236 = vadd.f32 %v186, %v220
    %v237 = vadd.f32 %v187, %v221
    %v238 = vadd.f32 %v188, %v222
    %v239 = vld [vmem:[#allocation8] sm:$0xff]
    %v240 = vld [vmem:[#allocation8 + $0x8] sm:$0xff]
    %v241 = vld [vmem:[#allocation8 + $0x10] sm:$0xff]
    %v242 = vld [vmem:[#allocation8 + $0x18] sm:$0xff]
    %v243 = vld [vmem:[#allocation8 + $0x20] sm:$0xff]
    %v244 = vld [vmem:[#allocation8 + $0x28] sm:$0xff]
    %v245 = vld [vmem:[#allocation8 + $0x30] sm:$0xff]
    %v246 = vld [vmem:[#allocation8 + $0x38] sm:$0xff]
    %v247 = vld [vmem:[#allocation8 + $0x40] sm:$0xff]
    %v248 = vld [vmem:[#allocation8 + $0x48] sm:$0xff]
    %v249 = vld [vmem:[#allocation8 + $0x50] sm:$0xff]
    %v250 = vld [vmem:[#allocation8 + $0x58] sm:$0xff]
    %v251 = vld [vmem:[#allocation8 + $0x60] sm:$0xff]
    %v252 = vld [vmem:[#allocation8 + $0x68] sm:$0xff]
    %v253 = vld [vmem:[#allocation8 + $0x70] sm:$0xff]
    %v254 = vld [vmem:[#allocation8 + $0x78] sm:$0xff]
    %v255 = vstv %s109
    %v256 = vmul.f32 %v239, %v255
    %v257 = vmul.f32 %v240, %v255
    %v258 = vmul.f32 %v241, %v255
    %v259 = vmul.f32 %v242, %v255
    %v260 = vmul.f32 %v243, %v255
    %v261 = vmul.f32 %v244, %v255
    %v262 = vmul.f32 %v245, %v255
    %v263 = vmul.f32 %v246, %v255
    %v264 = vmul.f32 %v247, %v255
    %v265 = vmul.f32 %v248, %v255
    %v266 = vmul.f32 %v249, %v255
    %v267 = vmul.f32 %v250, %v255
    %v268 = vmul.f32 %v251, %v255
    %v269 = vmul.f32 %v252, %v255
    %v270 = vmul.f32 %v253, %v255
    %v271 = vmul.f32 %v254, %v255
    %s272 = scalar_lea.vmem [#allocation8], 128
    %v273 = vld [vmem:[%s272] sm:$0xff]
    %v274 = vld [vmem:[%s272 + $0x8] sm:$0xff]
    %v275 = vld [vmem:[%s272 + $0x10] sm:$0xff]
    %v276 = vld [vmem:[%s272 + $0x18] sm:$0xff]
    %v277 = vld [vmem:[%s272 + $0x20] sm:$0xff]
    %v278 = vld [vmem:[%s272 + $0x28] sm:$0xff]
    %v279 = vld [vmem:[%s272 + $0x30] sm:$0xff]
    %v280 = vld [vmem:[%s272 + $0x38] sm:$0xff]
    %v281 = vld [vmem:[%s272 + $0x40] sm:$0xff]
    %v282 = vld [vmem:[%s272 + $0x48] sm:$0xff]
    %v283 = vld [vmem:[%s272 + $0x50] sm:$0xff]
    %v284 = vld [vmem:[%s272 + $0x58] sm:$0xff]
    %v285 = vld [vmem:[%s272 + $0x60] sm:$0xff]
    %v286 = vld [vmem:[%s272 + $0x68] sm:$0xff]
    %v287 = vld [vmem:[%s272 + $0x70] sm:$0xff]
    %v288 = vld [vmem:[%s272 + $0x78] sm:$0xff]
    %v289 = vstv %s111
    %v290 = vmul.f32 %v273, %v289
    %v291 = vmul.f32 %v274, %v289
    %v292 = vmul.f32 %v275, %v289
    %v293 = vmul.f32 %v276, %v289
    %v294 = vmul.f32 %v277, %v289
    %v295 = vmul.f32 %v278, %v289
    %v296 = vmul.f32 %v279, %v289
    %v297 = vmul.f32 %v280, %v289
    %v298 = vmul.f32 %v281, %v289
    %v299 = vmul.f32 %v282, %v289
    %v300 = vmul.f32 %v283, %v289
    %v301 = vmul.f32 %v284, %v289
    %v302 = vmul.f32 %v285, %v289
    %v303 = vmul.f32 %v286, %v289
    %v304 = vmul.f32 %v287, %v289
    %v305 = vmul.f32 %v288, %v289
    %v306 = vadd.f32 %v256, %v290
    %v307 = vadd.f32 %v257, %v291
    %v308 = vadd.f32 %v258, %v292
    %v309 = vadd.f32 %v259, %v293
    %v310 = vadd.f32 %v260, %v294
    %v311 = vadd.f32 %v261, %v295
    %v312 = vadd.f32 %v262, %v296
    %v313 = vadd.f32 %v263, %v297
    %v314 = vadd.f32 %v264, %v298
    %v315 = vadd.f32 %v265, %v299
    %v316 = vadd.f32 %v266, %v300
    %v317 = vadd.f32 %v267, %v301
    %v318 = vadd.f32 %v268, %v302
    %v319 = vadd.f32 %v269, %v303
    %v320 = vadd.f32 %v270, %v304
    %v321 = vadd.f32 %v271, %v305
    %v322 = vadd.f32 %v223, %v306
    %v323 = vadd.f32 %v224, %v307
    %v324 = vadd.f32 %v225, %v308
    %v325 = vadd.f32 %v226, %v309
    %v326 = vadd.f32 %v227, %v310
    %v327 = vadd.f32 %v228, %v311
    %v328 = vadd.f32 %v229, %v312
    %v329 = vadd.f32 %v230, %v313
    %v330 = vadd.f32 %v231, %v314
    %v331 = vadd.f32 %v232, %v315
    %v332 = vadd.f32 %v233, %v316
    %v333 = vadd.f32 %v234, %v317
    %v334 = vadd.f32 %v235, %v318
    %v335 = vadd.f32 %v236, %v319
    %v336 = vadd.f32 %v237, %v320
    %v337 = vadd.f32 %v238, %v321
    %v338 = vstv %s121
    %v339 = vadd.f32 %v140, %v338
    %v340 = vadd.f32 %v141, %v338
    %v341 = vadd.f32 %v142, %v338
    %v342 = vadd.f32 %v143, %v338
    %v343 = vadd.f32 %v144, %v338
    %v344 = vadd.f32 %v145, %v338
    %v345 = vadd.f32 %v146, %v338
    %v346 = vadd.f32 %v147, %v338
    %v347 = vadd.f32 %v148, %v338
    %v348 = vadd.f32 %v149, %v338
    %v349 = vadd.f32 %v150, %v338
    %v350 = vadd.f32 %v151, %v338
    %v351 = vadd.f32 %v152, %v338
    %v352 = vadd.f32 %v153, %v338
    %v353 = vadd.f32 %v154, %v338
    %v354 = vadd.f32 %v155, %v338
    %v355 = vadd.f32 %v322, %v339
    %v356 = vadd.f32 %v323, %v340
    %v357 = vadd.f32 %v324, %v341
    %v358 = vadd.f32 %v325, %v342
    %v359 = vadd.f32 %v326, %v343
    %v360 = vadd.f32 %v327, %v344
    %v361 = vadd.f32 %v328, %v345
    %v362 = vadd.f32 %v329, %v346
    %v363 = vadd.f32 %v330, %v347
    %v364 = vadd.f32 %v331, %v348
    %v365 = vadd.f32 %v332, %v349
    %v366 = vadd.f32 %v333, %v350
    %v367 = vadd.f32 %v334, %v351
    %v368 = vadd.f32 %v335, %v352
    %v369 = vadd.f32 %v336, %v353
    %v370 = vadd.f32 %v337, %v354
    %v371 = vmul.f32 %v355, 0.5
    %v372 = vmul.f32 %v356, 0.5
    %v373 = vmul.f32 %v357, 0.5
    %v374 = vmul.f32 %v358, 0.5
    %v375 = vmul.f32 %v359, 0.5
    %v376 = vmul.f32 %v360, 0.5
    %v377 = vmul.f32 %v361, 0.5
    %v378 = vmul.f32 %v362, 0.5
    %v379 = vmul.f32 %v363, 0.5
    %v380 = vmul.f32 %v364, 0.5
    %v381 = vmul.f32 %v365, 0.5
    %v382 = vmul.f32 %v366, 0.5
    %v383 = vmul.f32 %v367, 0.5
    %v384 = vmul.f32 %v368, 0.5
    %v385 = vmul.f32 %v369, 0.5
    %v386 = vmul.f32 %v370, 0.5
    %v387 = vtanh.pop %v371
    %v388 = vtanh.pop %v372
    %v389 = vtanh.pop %v373
    %v390 = vtanh.pop %v374
    %v391 = vtanh.pop %v375
    %v392 = vtanh.pop %v376
    %v393 = vtanh.pop %v377
    %v394 = vtanh.pop %v378
    %v395 = vtanh.pop %v379
    %v396 = vtanh.pop %v380
    %v397 = vtanh.pop %v381
    %v398 = vtanh.pop %v382
    %v399 = vtanh.pop %v383
    %v400 = vtanh.pop %v384
    %v401 = vtanh.pop %v385
    %v402 = vtanh.pop %v386
    %v403 = vmul.f32 %v387, 0.5
    %v404 = vmul.f32 %v388, 0.5
    %v405 = vmul.f32 %v389, 0.5
    %v406 = vmul.f32 %v390, 0.5
    %v407 = vmul.f32 %v391, 0.5
    %v408 = vmul.f32 %v392, 0.5
    %v409 = vmul.f32 %v393, 0.5
    %v410 = vmul.f32 %v394, 0.5
    %v411 = vmul.f32 %v395, 0.5
    %v412 = vmul.f32 %v396, 0.5
    %v413 = vmul.f32 %v397, 0.5
    %v414 = vmul.f32 %v398, 0.5
    %v415 = vmul.f32 %v399, 0.5
    %v416 = vmul.f32 %v400, 0.5
    %v417 = vmul.f32 %v401, 0.5
    %v418 = vmul.f32 %v402, 0.5
    %v419 = vadd.f32 %v403, 0.5
    %v420 = vadd.f32 %v404, 0.5
    %v421 = vadd.f32 %v405, 0.5
    %v422 = vadd.f32 %v406, 0.5
    %v423 = vadd.f32 %v407, 0.5
    %v424 = vadd.f32 %v408, 0.5
    %v425 = vadd.f32 %v409, 0.5
    %v426 = vadd.f32 %v410, 0.5
    %v427 = vadd.f32 %v411, 0.5
    %v428 = vadd.f32 %v412, 0.5
    %v429 = vadd.f32 %v413, 0.5
    %v430 = vadd.f32 %v414, 0.5
    %v431 = vadd.f32 %v415, 0.5
    %v432 = vadd.f32 %v416, 0.5
    %v433 = vadd.f32 %v417, 0.5
    %v434 = vadd.f32 %v418, 0.5
    %435 = vst [vmem:[#allocation14] sm:$0xff] %v419
    %436 = vst [vmem:[#allocation14 + $0x8] sm:$0xff] %v420
    %437 = vst [vmem:[#allocation14 + $0x10] sm:$0xff] %v421
    %438 = vst [vmem:[#allocation14 + $0x18] sm:$0xff] %v422
    %439 = vst [vmem:[#allocation14 + $0x20] sm:$0xff] %v423
    %440 = vst [vmem:[#allocation14 + $0x28] sm:$0xff] %v424
    %441 = vst [vmem:[#allocation14 + $0x30] sm:$0xff] %v425
    %442 = vst [vmem:[#allocation14 + $0x38] sm:$0xff] %v426
    %443 = vst [vmem:[#allocation14 + $0x40] sm:$0xff] %v427
    %444 = vst [vmem:[#allocation14 + $0x48] sm:$0xff] %v428
    %445 = vst [vmem:[#allocation14 + $0x50] sm:$0xff] %v429
    %446 = vst [vmem:[#allocation14 + $0x58] sm:$0xff] %v430
    %447 = vst [vmem:[#allocation14 + $0x60] sm:$0xff] %v431
    %448 = vst [vmem:[#allocation14 + $0x68] sm:$0xff] %v432
    %449 = vst [vmem:[#allocation14 + $0x70] sm:$0xff] %v433
    %450 = vst [vmem:[#allocation14 + $0x78] sm:$0xff] %v434
    %v451 = vld [vmem:[#allocation6] sm:$0xff]
    %v452 = vld [vmem:[#allocation6 + $0x8] sm:$0xff]
    %v453 = vld [vmem:[#allocation6 + $0x10] sm:$0xff]
    %v454 = vld [vmem:[#allocation6 + $0x18] sm:$0xff]
    %v455 = vld [vmem:[#allocation6 + $0x20] sm:$0xff]
    %v456 = vld [vmem:[#allocation6 + $0x28] sm:$0xff]
    %v457 = vld [vmem:[#allocation6 + $0x30] sm:$0xff]
    %v458 = vld [vmem:[#allocation6 + $0x38] sm:$0xff]
    %v459 = vld [vmem:[#allocation6 + $0x40] sm:$0xff]
    %v460 = vld [vmem:[#allocation6 + $0x48] sm:$0xff]
    %v461 = vld [vmem:[#allocation6 + $0x50] sm:$0xff]
    %v462 = vld [vmem:[#allocation6 + $0x58] sm:$0xff]
    %v463 = vld [vmem:[#allocation6 + $0x60] sm:$0xff]
    %v464 = vld [vmem:[#allocation6 + $0x68] sm:$0xff]
    %v465 = vld [vmem:[#allocation6 + $0x70] sm:$0xff]
    %v466 = vld [vmem:[#allocation6 + $0x78] sm:$0xff]
    %v467 = vstv %s113
    %v468 = vmul.f32 %v451, %v467
    %v469 = vmul.f32 %v452, %v467
    %v470 = vmul.f32 %v453, %v467
    %v471 = vmul.f32 %v454, %v467
    %v472 = vmul.f32 %v455, %v467
    %v473 = vmul.f32 %v456, %v467
    %v474 = vmul.f32 %v457, %v467
    %v475 = vmul.f32 %v458, %v467
    %v476 = vmul.f32 %v459, %v467
    %v477 = vmul.f32 %v460, %v467
    %v478 = vmul.f32 %v461, %v467
    %v479 = vmul.f32 %v462, %v467
    %v480 = vmul.f32 %v463, %v467
    %v481 = vmul.f32 %v464, %v467
    %v482 = vmul.f32 %v465, %v467
    %v483 = vmul.f32 %v466, %v467
    %v484 = vld [vmem:[%s189] sm:$0xff]
    %v485 = vld [vmem:[%s189 + $0x8] sm:$0xff]
    %v486 = vld [vmem:[%s189 + $0x10] sm:$0xff]
    %v487 = vld [vmem:[%s189 + $0x18] sm:$0xff]
    %v488 = vld [vmem:[%s189 + $0x20] sm:$0xff]
    %v489 = vld [vmem:[%s189 + $0x28] sm:$0xff]
    %v490 = vld [vmem:[%s189 + $0x30] sm:$0xff]
    %v491 = vld [vmem:[%s189 + $0x38] sm:$0xff]
    %v492 = vld [vmem:[%s189 + $0x40] sm:$0xff]
    %v493 = vld [vmem:[%s189 + $0x48] sm:$0xff]
    %v494 = vld [vmem:[%s189 + $0x50] sm:$0xff]
    %v495 = vld [vmem:[%s189 + $0x58] sm:$0xff]
    %v496 = vld [vmem:[%s189 + $0x60] sm:$0xff]
    %v497 = vld [vmem:[%s189 + $0x68] sm:$0xff]
    %v498 = vld [vmem:[%s189 + $0x70] sm:$0xff]
    %v499 = vld [vmem:[%s189 + $0x78] sm:$0xff]
    %v500 = vstv %s115
    %v501 = vmul.f32 %v484, %v500
    %v502 = vmul.f32 %v485, %v500
    %v503 = vmul.f32 %v486, %v500
    %v504 = vmul.f32 %v487, %v500
    %v505 = vmul.f32 %v488, %v500
    %v506 = vmul.f32 %v489, %v500
    %v507 = vmul.f32 %v490, %v500
    %v508 = vmul.f32 %v491, %v500
    %v509 = vmul.f32 %v492, %v500
    %v510 = vmul.f32 %v493, %v500
    %v511 = vmul.f32 %v494, %v500
    %v512 = vmul.f32 %v495, %v500
    %v513 = vmul.f32 %v496, %v500
    %v514 = vmul.f32 %v497, %v500
    %v515 = vmul.f32 %v498, %v500
    %v516 = vmul.f32 %v499, %v500
    %v517 = vadd.f32 %v468, %v501
    %v518 = vadd.f32 %v469, %v502
    %v519 = vadd.f32 %v470, %v503
    %v520 = vadd.f32 %v471, %v504
    %v521 = vadd.f32 %v472, %v505
    %v522 = vadd.f32 %v473, %v506
    %v523 = vadd.f32 %v474, %v507
    %v524 = vadd.f32 %v475, %v508
    %v525 = vadd.f32 %v476, %v509
    %v526 = vadd.f32 %v477, %v510
    %v527 = vadd.f32 %v478, %v511
    %v528 = vadd.f32 %v479, %v512
    %v529 = vadd.f32 %v480, %v513
    %v530 = vadd.f32 %v481, %v514
    %v531 = vadd.f32 %v482, %v515
    %v532 = vadd.f32 %v483, %v516
    %v533 = vld [vmem:[#allocation8] sm:$0xff]
    %v534 = vld [vmem:[#allocation8 + $0x8] sm:$0xff]
    %v535 = vld [vmem:[#allocation8 + $0x10] sm:$0xff]
    %v536 = vld [vmem:[#allocation8 + $0x18] sm:$0xff]
    %v537 = vld [vmem:[#allocation8 + $0x20] sm:$0xff]
    %v538 = vld [vmem:[#allocation8 + $0x28] sm:$0xff]
    %v539 = vld [vmem:[#allocation8 + $0x30] sm:$0xff]
    %v540 = vld [vmem:[#allocation8 + $0x38] sm:$0xff]
    %v541 = vld [vmem:[#allocation8 + $0x40] sm:$0xff]
    %v542 = vld [vmem:[#allocation8 + $0x48] sm:$0xff]
    %v543 = vld [vmem:[#allocation8 + $0x50] sm:$0xff]
    %v544 = vld [vmem:[#allocation8 + $0x58] sm:$0xff]
    %v545 = vld [vmem:[#allocation8 + $0x60] sm:$0xff]
    %v546 = vld [vmem:[#allocation8 + $0x68] sm:$0xff]
    %v547 = vld [vmem:[#allocation8 + $0x70] sm:$0xff]
    %v548 = vld [vmem:[#allocation8 + $0x78] sm:$0xff]
    %v549 = vstv %s117
    %v550 = vmul.f32 %v533, %v549
    %v551 = vmul.f32 %v534, %v549
    %v552 = vmul.f32 %v535, %v549
    %v553 = vmul.f32 %v536, %v549
    %v554 = vmul.f32 %v537, %v549
    %v555 = vmul.f32 %v538, %v549
    %v556 = vmul.f32 %v539, %v549
    %v557 = vmul.f32 %v540, %v549
    %v558 = vmul.f32 %v541, %v549
    %v559 = vmul.f32 %v542, %v549
    %v560 = vmul.f32 %v543, %v549
    %v561 = vmul.f32 %v544, %v549
    %v562 = vmul.f32 %v545, %v549
    %v563 = vmul.f32 %v546, %v549
    %v564 = vmul.f32 %v547, %v549
    %v565 = vmul.f32 %v548, %v549
    %v566 = vld [vmem:[%s272] sm:$0xff]
    %v567 = vld [vmem:[%s272 + $0x8] sm:$0xff]
    %v568 = vld [vmem:[%s272 + $0x10] sm:$0xff]
    %v569 = vld [vmem:[%s272 + $0x18] sm:$0xff]
    %v570 = vld [vmem:[%s272 + $0x20] sm:$0xff]
    %v571 = vld [vmem:[%s272 + $0x28] sm:$0xff]
    %v572 = vld [vmem:[%s272 + $0x30] sm:$0xff]
    %v573 = vld [vmem:[%s272 + $0x38] sm:$0xff]
    %v574 = vld [vmem:[%s272 + $0x40] sm:$0xff]
    %v575 = vld [vmem:[%s272 + $0x48] sm:$0xff]
    %v576 = vld [vmem:[%s272 + $0x50] sm:$0xff]
    %v577 = vld [vmem:[%s272 + $0x58] sm:$0xff]
    %v578 = vld [vmem:[%s272 + $0x60] sm:$0xff]
    %v579 = vld [vmem:[%s272 + $0x68] sm:$0xff]
    %v580 = vld [vmem:[%s272 + $0x70] sm:$0xff]
    %v581 = vld [vmem:[%s272 + $0x78] sm:$0xff]
    %v582 = vstv %s119
    %v583 = vmul.f32 %v566, %v582
    %v584 = vmul.f32 %v567, %v582
    %v585 = vmul.f32 %v568, %v582
    %v586 = vmul.f32 %v569, %v582
    %v587 = vmul.f32 %v570, %v582
    %v588 = vmul.f32 %v571, %v582
    %v589 = vmul.f32 %v572, %v582
    %v590 = vmul.f32 %v573, %v582
    %v591 = vmul.f32 %v574, %v582
    %v592 = vmul.f32 %v575, %v582
    %v593 = vmul.f32 %v576, %v582
    %v594 = vmul.f32 %v577, %v582
    %v595 = vmul.f32 %v578, %v582
    %v596 = vmul.f32 %v579, %v582
    %v597 = vmul.f32 %v580, %v582
    %v598 = vmul.f32 %v581, %v582
    %v599 = vadd.f32 %v550, %v583
    %v600 = vadd.f32 %v551, %v584
    %v601 = vadd.f32 %v552, %v585
    %v602 = vadd.f32 %v553, %v586
    %v603 = vadd.f32 %v554, %v587
    %v604 = vadd.f32 %v555, %v588
    %v605 = vadd.f32 %v556, %v589
    %v606 = vadd.f32 %v557, %v590
    %v607 = vadd.f32 %v558, %v591
    %v608 = vadd.f32 %v559, %v592
    %v609 = vadd.f32 %v560, %v593
    %v610 = vadd.f32 %v561, %v594
    %v611 = vadd.f32 %v562, %v595
    %v612 = vadd.f32 %v563, %v596
    %v613 = vadd.f32 %v564, %v597
    %v614 = vadd.f32 %v565, %v598
    %v615 = vadd.f32 %v517, %v599
    %v616 = vadd.f32 %v518, %v600
    %v617 = vadd.f32 %v519, %v601
    %v618 = vadd.f32 %v520, %v602
    %v619 = vadd.f32 %v521, %v603
    %v620 = vadd.f32 %v522, %v604
    %v621 = vadd.f32 %v523, %v605
    %v622 = vadd.f32 %v524, %v606
    %v623 = vadd.f32 %v525, %v607
    %v624 = vadd.f32 %v526, %v608
    %v625 = vadd.f32 %v527, %v609
    %v626 = vadd.f32 %v528, %v610
    %v627 = vadd.f32 %v529, %v611
    %v628 = vadd.f32 %v530, %v612
    %v629 = vadd.f32 %v531, %v613
    %v630 = vadd.f32 %v532, %v614
    %v631 = vstv %s123
    %v632 = vadd.f32 %v140, %v631
    %v633 = vadd.f32 %v141, %v631
    %v634 = vadd.f32 %v142, %v631
    %v635 = vadd.f32 %v143, %v631
    %v636 = vadd.f32 %v144, %v631
    %v637 = vadd.f32 %v145, %v631
    %v638 = vadd.f32 %v146, %v631
    %v639 = vadd.f32 %v147, %v631
    %v640 = vadd.f32 %v148, %v631
    %v641 = vadd.f32 %v149, %v631
    %v642 = vadd.f32 %v150, %v631
    %v643 = vadd.f32 %v151, %v631
    %v644 = vadd.f32 %v152, %v631
    %v645 = vadd.f32 %v153, %v631
    %v646 = vadd.f32 %v154, %v631
    %v647 = vadd.f32 %v155, %v631
    %v648 = vadd.f32 %v615, %v632
    %v649 = vadd.f32 %v616, %v633
    %v650 = vadd.f32 %v617, %v634
    %v651 = vadd.f32 %v618, %v635
    %v652 = vadd.f32 %v619, %v636
    %v653 = vadd.f32 %v620, %v637
    %v654 = vadd.f32 %v621, %v638
    %v655 = vadd.f32 %v622, %v639
    %v656 = vadd.f32 %v623, %v640
    %v657 = vadd.f32 %v624, %v641
    %v658 = vadd.f32 %v625, %v642
    %v659 = vadd.f32 %v626, %v643
    %v660 = vadd.f32 %v627, %v644
    %v661 = vadd.f32 %v628, %v645
    %v662 = vadd.f32 %v629, %v646
    %v663 = vadd.f32 %v630, %v647
    %v664 = vmul.f32 %v648, 0.5
    %v665 = vmul.f32 %v649, 0.5
    %v666 = vmul.f32 %v650, 0.5
    %v667 = vmul.f32 %v651, 0.5
    %v668 = vmul.f32 %v652, 0.5
    %v669 = vmul.f32 %v653, 0.5
    %v670 = vmul.f32 %v654, 0.5
    %v671 = vmul.f32 %v655, 0.5
    %v672 = vmul.f32 %v656, 0.5
    %v673 = vmul.f32 %v657, 0.5
    %v674 = vmul.f32 %v658, 0.5
    %v675 = vmul.f32 %v659, 0.5
    %v676 = vmul.f32 %v660, 0.5
    %v677 = vmul.f32 %v661, 0.5
    %v678 = vmul.f32 %v662, 0.5
    %v679 = vmul.f32 %v663, 0.5
    %v680 = vtanh.pop %v664
    %v681 = vtanh.pop %v665
    %v682 = vtanh.pop %v666
    %v683 = vtanh.pop %v667
    %v684 = vtanh.pop %v668
    %v685 = vtanh.pop %v669
    %v686 = vtanh.pop %v670
    %v687 = vtanh.pop %v671
    %v688 = vtanh.pop %v672
    %v689 = vtanh.pop %v673
    %v690 = vtanh.pop %v674
    %v691 = vtanh.pop %v675
    %v692 = vtanh.pop %v676
    %v693 = vtanh.pop %v677
    %v694 = vtanh.pop %v678
    %v695 = vtanh.pop %v679
    %v696 = vmul.f32 %v680, 0.5
    %v697 = vmul.f32 %v681, 0.5
    %v698 = vmul.f32 %v682, 0.5
    %v699 = vmul.f32 %v683, 0.5
    %v700 = vmul.f32 %v684, 0.5
    %v701 = vmul.f32 %v685, 0.5
    %v702 = vmul.f32 %v686, 0.5
    %v703 = vmul.f32 %v687, 0.5
    %v704 = vmul.f32 %v688, 0.5
    %v705 = vmul.f32 %v689, 0.5
    %v706 = vmul.f32 %v690, 0.5
    %v707 = vmul.f32 %v691, 0.5
    %v708 = vmul.f32 %v692, 0.5
    %v709 = vmul.f32 %v693, 0.5
    %v710 = vmul.f32 %v694, 0.5
    %v711 = vmul.f32 %v695, 0.5
    %v712 = vadd.f32 %v696, 0.5
    %v713 = vadd.f32 %v697, 0.5
    %v714 = vadd.f32 %v698, 0.5
    %v715 = vadd.f32 %v699, 0.5
    %v716 = vadd.f32 %v700, 0.5
    %v717 = vadd.f32 %v701, 0.5
    %v718 = vadd.f32 %v702, 0.5
    %v719 = vadd.f32 %v703, 0.5
    %v720 = vadd.f32 %v704, 0.5
    %v721 = vadd.f32 %v705, 0.5
    %v722 = vadd.f32 %v706, 0.5
    %v723 = vadd.f32 %v707, 0.5
    %v724 = vadd.f32 %v708, 0.5
    %v725 = vadd.f32 %v709, 0.5
    %v726 = vadd.f32 %v710, 0.5
    %v727 = vadd.f32 %v711, 0.5
    %s728 = scalar_lea.vmem [#allocation14], 128
    %729 = vst [vmem:[%s728] sm:$0xff] %v712
    %730 = vst [vmem:[%s728 + $0x8] sm:$0xff] %v713
    %731 = vst [vmem:[%s728 + $0x10] sm:$0xff] %v714
    %732 = vst [vmem:[%s728 + $0x18] sm:$0xff] %v715
    %733 = vst [vmem:[%s728 + $0x20] sm:$0xff] %v716
    %734 = vst [vmem:[%s728 + $0x28] sm:$0xff] %v717
    %735 = vst [vmem:[%s728 + $0x30] sm:$0xff] %v718
    %736 = vst [vmem:[%s728 + $0x38] sm:$0xff] %v719
    %737 = vst [vmem:[%s728 + $0x40] sm:$0xff] %v720
    %738 = vst [vmem:[%s728 + $0x48] sm:$0xff] %v721
    %739 = vst [vmem:[%s728 + $0x50] sm:$0xff] %v722
    %740 = vst [vmem:[%s728 + $0x58] sm:$0xff] %v723
    %741 = vst [vmem:[%s728 + $0x60] sm:$0xff] %v724
    %742 = vst [vmem:[%s728 + $0x68] sm:$0xff] %v725
    %743 = vst [vmem:[%s728 + $0x70] sm:$0xff] %v726
    %744 = vst [vmem:[%s728 + $0x78] sm:$0xff] %v727
    %v745 = vld [vmem:[#allocation14] sm:$0xff]
    %v746 = vld [vmem:[#allocation14 + $0x8] sm:$0xff]
    %v747 = vld [vmem:[#allocation14 + $0x10] sm:$0xff]
    %v748 = vld [vmem:[#allocation14 + $0x18] sm:$0xff]
    %v749 = vld [vmem:[#allocation14 + $0x20] sm:$0xff]
    %v750 = vld [vmem:[#allocation14 + $0x28] sm:$0xff]
    %v751 = vld [vmem:[#allocation14 + $0x30] sm:$0xff]
    %v752 = vld [vmem:[#allocation14 + $0x38] sm:$0xff]
    %v753 = vld [vmem:[#allocation14 + $0x40] sm:$0xff]
    %v754 = vld [vmem:[#allocation14 + $0x48] sm:$0xff]
    %v755 = vld [vmem:[#allocation14 + $0x50] sm:$0xff]
    %v756 = vld [vmem:[#allocation14 + $0x58] sm:$0xff]
    %v757 = vld [vmem:[#allocation14 + $0x60] sm:$0xff]
    %v758 = vld [vmem:[#allocation14 + $0x68] sm:$0xff]
    %v759 = vld [vmem:[#allocation14 + $0x70] sm:$0xff]
    %v760 = vld [vmem:[#allocation14 + $0x78] sm:$0xff]
    %v761 = vld [vmem:[%s728] sm:$0xff]
    %v762 = vld [vmem:[%s728 + $0x8] sm:$0xff]
    %v763 = vld [vmem:[%s728 + $0x10] sm:$0xff]
    %v764 = vld [vmem:[%s728 + $0x18] sm:$0xff]
    %v765 = vld [vmem:[%s728 + $0x20] sm:$0xff]
    %v766 = vld [vmem:[%s728 + $0x28] sm:$0xff]
    %v767 = vld [vmem:[%s728 + $0x30] sm:$0xff]
    %v768 = vld [vmem:[%s728 + $0x38] sm:$0xff]
    %v769 = vld [vmem:[%s728 + $0x40] sm:$0xff]
    %v770 = vld [vmem:[%s728 + $0x48] sm:$0xff]
    %v771 = vld [vmem:[%s728 + $0x50] sm:$0xff]
    %v772 = vld [vmem:[%s728 + $0x58] sm:$0xff]
    %v773 = vld [vmem:[%s728 + $0x60] sm:$0xff]
    %v774 = vld [vmem:[%s728 + $0x68] sm:$0xff]
    %v775 = vld [vmem:[%s728 + $0x70] sm:$0xff]
    %v776 = vld [vmem:[%s728 + $0x78] sm:$0xff]
    %v777 = vadd.f32 %v745, %v761
    %v778 = vadd.f32 %v746, %v762
    %v779 = vadd.f32 %v747, %v763
    %v780 = vadd.f32 %v748, %v764
    %v781 = vadd.f32 %v749, %v765
    %v782 = vadd.f32 %v750, %v766
    %v783 = vadd.f32 %v751, %v767
    %v784 = vadd.f32 %v752, %v768
    %v785 = vadd.f32 %v753, %v769
    %v786 = vadd.f32 %v754, %v770
    %v787 = vadd.f32 %v755, %v771
    %v788 = vadd.f32 %v756, %v772
    %v789 = vadd.f32 %v757, %v773
    %v790 = vadd.f32 %v758, %v774
    %v791 = vadd.f32 %v759, %v775
    %v792 = vadd.f32 %v760, %v776
    %v793 = vadd.f32 %v777, %v778
    %v794 = vadd.f32 %v793, %v779
    %v795 = vadd.f32 %v794, %v780
    %v796 = vadd.f32 %v795, %v781
    %v797 = vadd.f32 %v796, %v782
    %v798 = vadd.f32 %v797, %v783
    %v799 = vadd.f32 %v798, %v784
    %v800 = vadd.f32 %v799, %v785
    %v801 = vadd.f32 %v800, %v786
    %v802 = vadd.f32 %v801, %v787
    %v803 = vadd.f32 %v802, %v788
    %v804 = vadd.f32 %v803, %v789
    %v805 = vadd.f32 %v804, %v790
    %v806 = vadd.f32 %v805, %v791
    %v807 = vadd.f32 %v806, %v792
    %808 = vadd.xlane.f32.xlu0 %v807
    %v809 = vpop.xlane.xlu0 %808
    %v810 = vrot.slane %v809, 4
    %v811 = vadd.f32 %v809, %v810
    %v812 = vrot.slane %v811, 2
    %v813 = vadd.f32 %v811, %v812
    %v814 = vrot.slane %v813, 1
    %v815 = vadd.f32 %v813, %v814
    %s816 = vtos %v815
    %s817 = smul.f32 %s816, 3.0517578e-05
    %v818 = vstv %s817
    %v819 = vrcp.pop %v818
    %s820 = vtos %v819
    %s821 = smul.f32 0.6, %s820
    %s822 = ssub.f32 1.0, %s817
    %v823 = vstv %s822
    %v824 = vrcp.pop %v823
    %s825 = vtos %v824
    %s826 = smul.f32 0.4, %s825
    %p827 = scmp.le.f32.partialorder %s821, 1.0
    %s828 = scalar_select %p827, %s821, %s826
    %s829 = ssub.f32 1.0, %s826
    %s830 = scalar_select %p827, 0.0, %s829
    %v831 = vstv %s828
    %v832 = vmul.f32 %v831, %v745
    %v833 = vmul.f32 %v831, %v746
    %v834 = vmul.f32 %v831, %v747
    %v835 = vmul.f32 %v831, %v748
    %v836 = vmul.f32 %v831, %v749
    %v837 = vmul.f32 %v831, %v750
    %v838 = vmul.f32 %v831, %v751
    %v839 = vmul.f32 %v831, %v752
    %v840 = vmul.f32 %v831, %v753
    %v841 = vmul.f32 %v831, %v754
    %v842 = vmul.f32 %v831, %v755
    %v843 = vmul.f32 %v831, %v756
    %v844 = vmul.f32 %v831, %v757
    %v845 = vmul.f32 %v831, %v758
    %v846 = vmul.f32 %v831, %v759
    %v847 = vmul.f32 %v831, %v760
    %v848 = vstv %s830
    %v849 = vadd.f32 %v832, %v848
    %v850 = vadd.f32 %v833, %v848
    %v851 = vadd.f32 %v834, %v848
    %v852 = vadd.f32 %v835, %v848
    %v853 = vadd.f32 %v836, %v848
    %v854 = vadd.f32 %v837, %v848
    %v855 = vadd.f32 %v838, %v848
    %v856 = vadd.f32 %v839, %v848
    %v857 = vadd.f32 %v840, %v848
    %v858 = vadd.f32 %v841, %v848
    %v859 = vadd.f32 %v842, %v848
    %v860 = vadd.f32 %v843, %v848
    %v861 = vadd.f32 %v844, %v848
    %v862 = vadd.f32 %v845, %v848
    %v863 = vadd.f32 %v846, %v848
    %v864 = vadd.f32 %v847, %v848
    %v865 = vld [vmem:[#allocation12] sm:$0xff]
    %v866 = vld [vmem:[#allocation12 + $0x8] sm:$0xff]
    %v867 = vld [vmem:[#allocation12 + $0x10] sm:$0xff]
    %v868 = vld [vmem:[#allocation12 + $0x18] sm:$0xff]
    %v869 = vld [vmem:[#allocation12 + $0x20] sm:$0xff]
    %v870 = vld [vmem:[#allocation12 + $0x28] sm:$0xff]
    %v871 = vld [vmem:[#allocation12 + $0x30] sm:$0xff]
    %v872 = vld [vmem:[#allocation12 + $0x38] sm:$0xff]
    %v873 = vld [vmem:[#allocation12 + $0x40] sm:$0xff]
    %v874 = vld [vmem:[#allocation12 + $0x48] sm:$0xff]
    %v875 = vld [vmem:[#allocation12 + $0x50] sm:$0xff]
    %v876 = vld [vmem:[#allocation12 + $0x58] sm:$0xff]
    %v877 = vld [vmem:[#allocation12 + $0x60] sm:$0xff]
    %v878 = vld [vmem:[#allocation12 + $0x68] sm:$0xff]
    %v879 = vld [vmem:[#allocation12 + $0x70] sm:$0xff]
    %v880 = vld [vmem:[#allocation12 + $0x78] sm:$0xff]
    %v881 = vsub.f32 %v849, %v865
    %v882 = vsub.f32 %v850, %v866
    %v883 = vsub.f32 %v851, %v867
    %v884 = vsub.f32 %v852, %v868
    %v885 = vsub.f32 %v853, %v869
    %v886 = vsub.f32 %v854, %v870
    %v887 = vsub.f32 %v855, %v871
    %v888 = vsub.f32 %v856, %v872
    %v889 = vsub.f32 %v857, %v873
    %v890 = vsub.f32 %v858, %v874
    %v891 = vsub.f32 %v859, %v875
    %v892 = vsub.f32 %v860, %v876
    %v893 = vsub.f32 %v861, %v877
    %v894 = vsub.f32 %v862, %v878
    %v895 = vsub.f32 %v863, %v879
    %v896 = vsub.f32 %v864, %v880
    %v897 = vmul.f32 %v881, 12.0
    %v898 = vmul.f32 %v882, 12.0
    %v899 = vmul.f32 %v883, 12.0
    %v900 = vmul.f32 %v884, 12.0
    %v901 = vmul.f32 %v885, 12.0
    %v902 = vmul.f32 %v886, 12.0
    %v903 = vmul.f32 %v887, 12.0
    %v904 = vmul.f32 %v888, 12.0
    %v905 = vmul.f32 %v889, 12.0
    %v906 = vmul.f32 %v890, 12.0
    %v907 = vmul.f32 %v891, 12.0
    %v908 = vmul.f32 %v892, 12.0
    %v909 = vmul.f32 %v893, 12.0
    %v910 = vmul.f32 %v894, 12.0
    %v911 = vmul.f32 %v895, 12.0
    %v912 = vmul.f32 %v896, 12.0
    %v913 = vmul.f32 %v897, 0.5
    %v914 = vmul.f32 %v898, 0.5
    %v915 = vmul.f32 %v899, 0.5
    %v916 = vmul.f32 %v900, 0.5
    %v917 = vmul.f32 %v901, 0.5
    %v918 = vmul.f32 %v902, 0.5
    %v919 = vmul.f32 %v903, 0.5
    %v920 = vmul.f32 %v904, 0.5
    %v921 = vmul.f32 %v905, 0.5
    %v922 = vmul.f32 %v906, 0.5
    %v923 = vmul.f32 %v907, 0.5
    %v924 = vmul.f32 %v908, 0.5
    %v925 = vmul.f32 %v909, 0.5
    %v926 = vmul.f32 %v910, 0.5
    %v927 = vmul.f32 %v911, 0.5
    %v928 = vmul.f32 %v912, 0.5
    %v929 = vtanh.pop %v913
    %v930 = vtanh.pop %v914
    %v931 = vtanh.pop %v915
    %v932 = vtanh.pop %v916
    %v933 = vtanh.pop %v917
    %v934 = vtanh.pop %v918
    %v935 = vtanh.pop %v919
    %v936 = vtanh.pop %v920
    %v937 = vtanh.pop %v921
    %v938 = vtanh.pop %v922
    %v939 = vtanh.pop %v923
    %v940 = vtanh.pop %v924
    %v941 = vtanh.pop %v925
    %v942 = vtanh.pop %v926
    %v943 = vtanh.pop %v927
    %v944 = vtanh.pop %v928
    %v945 = vmul.f32 %v929, 0.5
    %v946 = vmul.f32 %v930, 0.5
    %v947 = vmul.f32 %v931, 0.5
    %v948 = vmul.f32 %v932, 0.5
    %v949 = vmul.f32 %v933, 0.5
    %v950 = vmul.f32 %v934, 0.5
    %v951 = vmul.f32 %v935, 0.5
    %v952 = vmul.f32 %v936, 0.5
    %v953 = vmul.f32 %v937, 0.5
    %v954 = vmul.f32 %v938, 0.5
    %v955 = vmul.f32 %v939, 0.5
    %v956 = vmul.f32 %v940, 0.5
    %v957 = vmul.f32 %v941, 0.5
    %v958 = vmul.f32 %v942, 0.5
    %v959 = vmul.f32 %v943, 0.5
    %v960 = vmul.f32 %v944, 0.5
    %v961 = vadd.f32 %v945, 0.5
    %v962 = vadd.f32 %v946, 0.5
    %v963 = vadd.f32 %v947, 0.5
    %v964 = vadd.f32 %v948, 0.5
    %v965 = vadd.f32 %v949, 0.5
    %v966 = vadd.f32 %v950, 0.5
    %v967 = vadd.f32 %v951, 0.5
    %v968 = vadd.f32 %v952, 0.5
    %v969 = vadd.f32 %v953, 0.5
    %v970 = vadd.f32 %v954, 0.5
    %v971 = vadd.f32 %v955, 0.5
    %v972 = vadd.f32 %v956, 0.5
    %v973 = vadd.f32 %v957, 0.5
    %v974 = vadd.f32 %v958, 0.5
    %v975 = vadd.f32 %v959, 0.5
    %v976 = vadd.f32 %v960, 0.5
    %977 = vst [vmem:[#allocation14] sm:$0xff] %v961
    %978 = vst [vmem:[#allocation14 + $0x8] sm:$0xff] %v962
    %979 = vst [vmem:[#allocation14 + $0x10] sm:$0xff] %v963
    %980 = vst [vmem:[#allocation14 + $0x18] sm:$0xff] %v964
    %981 = vst [vmem:[#allocation14 + $0x20] sm:$0xff] %v965
    %982 = vst [vmem:[#allocation14 + $0x28] sm:$0xff] %v966
    %983 = vst [vmem:[#allocation14 + $0x30] sm:$0xff] %v967
    %984 = vst [vmem:[#allocation14 + $0x38] sm:$0xff] %v968
    %985 = vst [vmem:[#allocation14 + $0x40] sm:$0xff] %v969
    %986 = vst [vmem:[#allocation14 + $0x48] sm:$0xff] %v970
    %987 = vst [vmem:[#allocation14 + $0x50] sm:$0xff] %v971
    %988 = vst [vmem:[#allocation14 + $0x58] sm:$0xff] %v972
    %989 = vst [vmem:[#allocation14 + $0x60] sm:$0xff] %v973
    %990 = vst [vmem:[#allocation14 + $0x68] sm:$0xff] %v974
    %991 = vst [vmem:[#allocation14 + $0x70] sm:$0xff] %v975
    %992 = vst [vmem:[#allocation14 + $0x78] sm:$0xff] %v976
    %v993 = vld [vmem:[%s728] sm:$0xff]
    %v994 = vld [vmem:[%s728 + $0x8] sm:$0xff]
    %v995 = vld [vmem:[%s728 + $0x10] sm:$0xff]
    %v996 = vld [vmem:[%s728 + $0x18] sm:$0xff]
    %v997 = vld [vmem:[%s728 + $0x20] sm:$0xff]
    %v998 = vld [vmem:[%s728 + $0x28] sm:$0xff]
    %v999 = vld [vmem:[%s728 + $0x30] sm:$0xff]
    %v1000 = vld [vmem:[%s728 + $0x38] sm:$0xff]
    %v1001 = vld [vmem:[%s728 + $0x40] sm:$0xff]
    %v1002 = vld [vmem:[%s728 + $0x48] sm:$0xff]
    %v1003 = vld [vmem:[%s728 + $0x50] sm:$0xff]
    %v1004 = vld [vmem:[%s728 + $0x58] sm:$0xff]
    %v1005 = vld [vmem:[%s728 + $0x60] sm:$0xff]
    %v1006 = vld [vmem:[%s728 + $0x68] sm:$0xff]
    %v1007 = vld [vmem:[%s728 + $0x70] sm:$0xff]
    %v1008 = vld [vmem:[%s728 + $0x78] sm:$0xff]
    %v1009 = vmul.f32 %v831, %v993
    %v1010 = vmul.f32 %v831, %v994
    %v1011 = vmul.f32 %v831, %v995
    %v1012 = vmul.f32 %v831, %v996
    %v1013 = vmul.f32 %v831, %v997
    %v1014 = vmul.f32 %v831, %v998
    %v1015 = vmul.f32 %v831, %v999
    %v1016 = vmul.f32 %v831, %v1000
    %v1017 = vmul.f32 %v831, %v1001
    %v1018 = vmul.f32 %v831, %v1002
    %v1019 = vmul.f32 %v831, %v1003
    %v1020 = vmul.f32 %v831, %v1004
    %v1021 = vmul.f32 %v831, %v1005
    %v1022 = vmul.f32 %v831, %v1006
    %v1023 = vmul.f32 %v831, %v1007
    %v1024 = vmul.f32 %v831, %v1008
    %v1025 = vadd.f32 %v1009, %v848
    %v1026 = vadd.f32 %v1010, %v848
    %v1027 = vadd.f32 %v1011, %v848
    %v1028 = vadd.f32 %v1012, %v848
    %v1029 = vadd.f32 %v1013, %v848
    %v1030 = vadd.f32 %v1014, %v848
    %v1031 = vadd.f32 %v1015, %v848
    %v1032 = vadd.f32 %v1016, %v848
    %v1033 = vadd.f32 %v1017, %v848
    %v1034 = vadd.f32 %v1018, %v848
    %v1035 = vadd.f32 %v1019, %v848
    %v1036 = vadd.f32 %v1020, %v848
    %v1037 = vadd.f32 %v1021, %v848
    %v1038 = vadd.f32 %v1022, %v848
    %v1039 = vadd.f32 %v1023, %v848
    %v1040 = vadd.f32 %v1024, %v848
    %s1041 = scalar_lea.vmem [#allocation12], 128
    %v1042 = vld [vmem:[%s1041] sm:$0xff]
    %v1043 = vld [vmem:[%s1041 + $0x8] sm:$0xff]
    %v1044 = vld [vmem:[%s1041 + $0x10] sm:$0xff]
    %v1045 = vld [vmem:[%s1041 + $0x18] sm:$0xff]
    %v1046 = vld [vmem:[%s1041 + $0x20] sm:$0xff]
    %v1047 = vld [vmem:[%s1041 + $0x28] sm:$0xff]
    %v1048 = vld [vmem:[%s1041 + $0x30] sm:$0xff]
    %v1049 = vld [vmem:[%s1041 + $0x38] sm:$0xff]
    %v1050 = vld [vmem:[%s1041 + $0x40] sm:$0xff]
    %v1051 = vld [vmem:[%s1041 + $0x48] sm:$0xff]
    %v1052 = vld [vmem:[%s1041 + $0x50] sm:$0xff]
    %v1053 = vld [vmem:[%s1041 + $0x58] sm:$0xff]
    %v1054 = vld [vmem:[%s1041 + $0x60] sm:$0xff]
    %v1055 = vld [vmem:[%s1041 + $0x68] sm:$0xff]
    %v1056 = vld [vmem:[%s1041 + $0x70] sm:$0xff]
    %v1057 = vld [vmem:[%s1041 + $0x78] sm:$0xff]
    %v1058 = vsub.f32 %v1025, %v1042
    %v1059 = vsub.f32 %v1026, %v1043
    %v1060 = vsub.f32 %v1027, %v1044
    %v1061 = vsub.f32 %v1028, %v1045
    %v1062 = vsub.f32 %v1029, %v1046
    %v1063 = vsub.f32 %v1030, %v1047
    %v1064 = vsub.f32 %v1031, %v1048
    %v1065 = vsub.f32 %v1032, %v1049
    %v1066 = vsub.f32 %v1033, %v1050
    %v1067 = vsub.f32 %v1034, %v1051
    %v1068 = vsub.f32 %v1035, %v1052
    %v1069 = vsub.f32 %v1036, %v1053
    %v1070 = vsub.f32 %v1037, %v1054
    %v1071 = vsub.f32 %v1038, %v1055
    %v1072 = vsub.f32 %v1039, %v1056
    %v1073 = vsub.f32 %v1040, %v1057
    %v1074 = vmul.f32 %v1058, 12.0
    %v1075 = vmul.f32 %v1059, 12.0
    %v1076 = vmul.f32 %v1060, 12.0
    %v1077 = vmul.f32 %v1061, 12.0
    %v1078 = vmul.f32 %v1062, 12.0
    %v1079 = vmul.f32 %v1063, 12.0
    %v1080 = vmul.f32 %v1064, 12.0
    %v1081 = vmul.f32 %v1065, 12.0
    %v1082 = vmul.f32 %v1066, 12.0
    %v1083 = vmul.f32 %v1067, 12.0
    %v1084 = vmul.f32 %v1068, 12.0
    %v1085 = vmul.f32 %v1069, 12.0
    %v1086 = vmul.f32 %v1070, 12.0
    %v1087 = vmul.f32 %v1071, 12.0
    %v1088 = vmul.f32 %v1072, 12.0
    %v1089 = vmul.f32 %v1073, 12.0
    %v1090 = vmul.f32 %v1074, 0.5
    %v1091 = vmul.f32 %v1075, 0.5
    %v1092 = vmul.f32 %v1076, 0.5
    %v1093 = vmul.f32 %v1077, 0.5
    %v1094 = vmul.f32 %v1078, 0.5
    %v1095 = vmul.f32 %v1079, 0.5
    %v1096 = vmul.f32 %v1080, 0.5
    %v1097 = vmul.f32 %v1081, 0.5
    %v1098 = vmul.f32 %v1082, 0.5
    %v1099 = vmul.f32 %v1083, 0.5
    %v1100 = vmul.f32 %v1084, 0.5
    %v1101 = vmul.f32 %v1085, 0.5
    %v1102 = vmul.f32 %v1086, 0.5
    %v1103 = vmul.f32 %v1087, 0.5
    %v1104 = vmul.f32 %v1088, 0.5
    %v1105 = vmul.f32 %v1089, 0.5
    %v1106 = vtanh.pop %v1090
    %v1107 = vtanh.pop %v1091
    %v1108 = vtanh.pop %v1092
    %v1109 = vtanh.pop %v1093
    %v1110 = vtanh.pop %v1094
    %v1111 = vtanh.pop %v1095
    %v1112 = vtanh.pop %v1096
    %v1113 = vtanh.pop %v1097
    %v1114 = vtanh.pop %v1098
    %v1115 = vtanh.pop %v1099
    %v1116 = vtanh.pop %v1100
    %v1117 = vtanh.pop %v1101
    %v1118 = vtanh.pop %v1102
    %v1119 = vtanh.pop %v1103
    %v1120 = vtanh.pop %v1104
    %v1121 = vtanh.pop %v1105
    %v1122 = vmul.f32 %v1106, 0.5
    %v1123 = vmul.f32 %v1107, 0.5
    %v1124 = vmul.f32 %v1108, 0.5
    %v1125 = vmul.f32 %v1109, 0.5
    %v1126 = vmul.f32 %v1110, 0.5
    %v1127 = vmul.f32 %v1111, 0.5
    %v1128 = vmul.f32 %v1112, 0.5
    %v1129 = vmul.f32 %v1113, 0.5
    %v1130 = vmul.f32 %v1114, 0.5
    %v1131 = vmul.f32 %v1115, 0.5
    %v1132 = vmul.f32 %v1116, 0.5
    %v1133 = vmul.f32 %v1117, 0.5
    %v1134 = vmul.f32 %v1118, 0.5
    %v1135 = vmul.f32 %v1119, 0.5
    %v1136 = vmul.f32 %v1120, 0.5
    %v1137 = vmul.f32 %v1121, 0.5
    %v1138 = vadd.f32 %v1122, 0.5
    %v1139 = vadd.f32 %v1123, 0.5
    %v1140 = vadd.f32 %v1124, 0.5
    %v1141 = vadd.f32 %v1125, 0.5
    %v1142 = vadd.f32 %v1126, 0.5
    %v1143 = vadd.f32 %v1127, 0.5
    %v1144 = vadd.f32 %v1128, 0.5
    %v1145 = vadd.f32 %v1129, 0.5
    %v1146 = vadd.f32 %v1130, 0.5
    %v1147 = vadd.f32 %v1131, 0.5
    %v1148 = vadd.f32 %v1132, 0.5
    %v1149 = vadd.f32 %v1133, 0.5
    %v1150 = vadd.f32 %v1134, 0.5
    %v1151 = vadd.f32 %v1135, 0.5
    %v1152 = vadd.f32 %v1136, 0.5
    %v1153 = vadd.f32 %v1137, 0.5
    %1154 = vst [vmem:[%s728] sm:$0xff] %v1138
    %1155 = vst [vmem:[%s728 + $0x8] sm:$0xff] %v1139
    %1156 = vst [vmem:[%s728 + $0x10] sm:$0xff] %v1140
    %1157 = vst [vmem:[%s728 + $0x18] sm:$0xff] %v1141
    %1158 = vst [vmem:[%s728 + $0x20] sm:$0xff] %v1142
    %1159 = vst [vmem:[%s728 + $0x28] sm:$0xff] %v1143
    %1160 = vst [vmem:[%s728 + $0x30] sm:$0xff] %v1144
    %1161 = vst [vmem:[%s728 + $0x38] sm:$0xff] %v1145
    %1162 = vst [vmem:[%s728 + $0x40] sm:$0xff] %v1146
    %1163 = vst [vmem:[%s728 + $0x48] sm:$0xff] %v1147
    %1164 = vst [vmem:[%s728 + $0x50] sm:$0xff] %v1148
    %1165 = vst [vmem:[%s728 + $0x58] sm:$0xff] %v1149
    %1166 = vst [vmem:[%s728 + $0x60] sm:$0xff] %v1150
    %1167 = vst [vmem:[%s728 + $0x68] sm:$0xff] %v1151
    %1168 = vst [vmem:[%s728 + $0x70] sm:$0xff] %v1152
    %1169 = vst [vmem:[%s728 + $0x78] sm:$0xff] %v1153
    // Predicated region
    $region50: #{tpu_custom_call.1} parent=1 // pred_check
      _
    $region51: #{tpu_custom_call.1} parent=1 // pred_check_branch
      %1171 = sbr.rel (0) target = $region53
    $region52: #{tpu_custom_call.1} parent=1 // pred_region
      %s1173 = ssub.s32 4096, 4096
      %1174 = vsyncadd [#allocation4], %s1173
      %s1175 = sshll.u32 [#allocation14], 4
      %s1176 = int_to_ptr.vmem [resolvable:$true] %s1175
      %1181 = dma.vmem_to_hbm [thread:$0]  %s1176, 4096, %s6, [#allocation4], 128, 128, 8
    $region53: #{tpu_custom_call.1} parent=1 // pred_fallthru
      _
    // Predicated region
    $region54: #{tpu_custom_call.1} parent=1 // pred_check
      _
    $region55: #{tpu_custom_call.1} parent=1 // pred_check_branch
      %1183 = sbr.rel (0) target = $region57
    $region56: #{tpu_custom_call.1} parent=1 // pred_region
      %1184 = dma.done [#allocation4], 4096
    $region57: #{tpu_custom_call.1} parent=1 // pred_fallthru
      _
    %1185 = vsyncpa [#allocation3], 1
    %1186 = vsyncpa [#allocation7], 1
    %1187 = vsyncpa [#allocation13], 1
    %1188 = vsyncpa [#allocation4], 1
    %1189 = vsyncpa [#allocation5], 1
    %1190 = vsyncpa [#allocation11], 1

</llo_original>
